<compile_context>
chip_gen: v6e
topology: v6e:2x2x1
jax: 0.10.0
libtpu: 0.0.40
codegen_flags: <defaults>
</compile_context>

<pallas_src>
import jax
import jax.numpy as jnp
from jax import lax
from jax.experimental import pallas as pl
from jax.experimental.pallas import tpu as pltpu

_BN_EPS = 1e-5


# --------------------------------------------------------------------------
# hoisted, once-per-parameter-set weight packing (do NOT run per call)
# --------------------------------------------------------------------------
def pack_resblock_params(params, W):
    """Fold the conv weights into MXU-ready lane-dense form for width W."""
    w1, b1, w2, b2, w3, b3 = params            # BN already folded, f32
    Cin, P = w1.shape
    WP, WC = W * P, W * Cin
    bf16 = jnp.bfloat16
    eye = jnp.eye(W, dtype=jnp.float32)

    # conv1 (1x1): block-diagonal over the folded W axis.
    # w1bd[w*Cin + c, v*P + p] = (w == v) * w1[c, p]
    w1bd = jnp.einsum('wv,cp->wcvp', eye, w1).reshape(WC, WP).astype(bf16)
    # conv3 (1x1): w3bd[w*P + p, v*Cin + c] = (w == v) * w3[p, c]
    w3bd = jnp.einsum('wv,pc->wpvc', eye, w3).reshape(WP, WC).astype(bf16)

    # conv2 (3x3, pad=1): one block-tridiagonal (WP, WP) weight per ky.
    # w2band[ky][u*P + p_in, v*P + p_out] = sum_kx (u == v + kx - 1) * w2[ky,kx,p_in,p_out]
    # (out-of-band entries are zero, which implements the horizontal zero pad).
    u = jnp.arange(W)
    bands = []
    for ky in range(3):
        acc = jnp.zeros((W, P, W, P), jnp.float32)
        for kx in range(3):
            sel = (u[:, None] == (u[None, :] + (kx - 1))).astype(jnp.float32)
            acc = acc + jnp.einsum('uv,io->uivo', sel, w2[ky, kx])
        bands.append(acc.reshape(WP, WP))
    w2band = jnp.stack(bands).astype(bf16)             # (3, WP, WP)

    b1f = jnp.tile(b1.reshape(1, P), (1, W))           # (1, W*P)   f32
    b2f = jnp.tile(b2.reshape(1, P), (1, W))           # (1, W*P)   f32
    b3f = jnp.tile(b3.reshape(1, Cin), (1, W))         # (1, W*Cin) f32
    return (w1bd, b1f, w2band, b2f, w3bd, b3f)


def _pick_batch_block(N, H, m_target=256):
    """Largest divisor NB of N with NB*H <= m_target (fills MXU rows)."""
    nb = 1
    for d in range(1, N + 1):
        if N % d == 0 and d * H <= m_target:
            nb = d
    return nb


# --------------------------------------------------------------------------
# Pallas forward (takes pre-packed weights)
# --------------------------------------------------------------------------
def resblock_forward_packed(x_nhwc, packed):
    """x_nhwc: (N, H, W, Cin) float32, Cin == 4*planes (identity residual)."""
    w1bd, b1f, w2band, b2f, w3bd, b3f = packed
    N, H, W, Cin = x_nhwc.shape
    WC, WP = w1bd.shape
    assert WC == W * Cin, "packed weights were built for a different W / Cin"
    P = WP // W
    assert Cin == 4 * P, "identity residual requires start_filts == 4*planes"
    bf16 = jnp.bfloat16

    NB = _pick_batch_block(N, H)                       # images per grid step
    M = NB * H                                         # matmul row count
    x_folded = x_nhwc.reshape(N, H, WC)                # lane-dense input

    def kernel(x_ref, w1_ref, b1_ref, w2_ref, b2_ref, w3_ref, b3_ref,
               out_ref, pad_ref):
        # ---- conv1: 1x1 + folded BN + ReLU (one (M, WC)x(WC, WP) matmul) ----
        xb = x_ref[...].reshape(M, WC).astype(bf16)
        h1 = jnp.dot(xb, w1_ref[...], preferred_element_type=jnp.float32)
        h1 = jnp.maximum(h1 + b1_ref[...], 0.0)                    # (M, WP)

        # write conv1 output into the vertically padded per-image scratch and
        # (re)zero only the two border rows per image.
        pad_ref[:, 1:H + 1, :] = h1.reshape(NB, H, WP)
        zrow = jnp.zeros((NB, 1, WP), jnp.float32)
        pad_ref[:, 0:1, :] = zrow
        pad_ref[:, H + 1:H + 2, :] = zrow

        # ---- conv2: 3x3, pad=1 as THREE accumulating banded matmuls ---------
        acc = None
        for ky in range(3):
            slab = pad_ref[:, ky:ky + H, :].reshape(M, WP).astype(bf16)
            part = jnp.dot(slab, w2_ref[ky],
                           preferred_element_type=jnp.float32)
            acc = part if acc is None else acc + part
        h2 = jnp.maximum(acc + b2_ref[...], 0.0).astype(bf16)      # (M, WP)

        # ---- conv3: 1x1 + folded BN (no ReLU) -------------------------------
        h3 = jnp.dot(h2, w3_ref[...], preferred_element_type=jnp.float32)
        h3 = h3 + b3_ref[...]                                      # (M, WC)

        # ---- residual (re-read from VMEM) + final ReLU ----------------------
        res = x_ref[...].reshape(M, WC)
        out = jnp.maximum(h3 + res, 0.0)
        out_ref[...] = out.reshape(NB, H, WC)

    out_folded = pl.pallas_call(
        kernel,
        out_shape=jax.ShapeDtypeStruct((N, H, WC), jnp.float32),
        grid_spec=pltpu.PrefetchScalarGridSpec(
            num_scalar_prefetch=0,
            grid=(N // NB,),
            in_specs=[
                pl.BlockSpec((NB, H, WC), lambda n: (n, 0, 0)),    # x (folded)
                pl.BlockSpec((WC, WP), lambda n: (0, 0)),          # w1 block-diag
                pl.BlockSpec((1, WP), lambda n: (0, 0)),           # b1 tiled
                pl.BlockSpec((3, WP, WP), lambda n: (0, 0, 0)),    # w2 banded
                pl.BlockSpec((1, WP), lambda n: (0, 0)),           # b2 tiled
                pl.BlockSpec((WP, WC), lambda n: (0, 0)),          # w3 block-diag
                pl.BlockSpec((1, WC), lambda n: (0, 0)),           # b3 tiled
            ],
            out_specs=pl.BlockSpec((NB, H, WC), lambda n: (n, 0, 0)),
            scratch_shapes=[pltpu.VMEM((NB, H + 2, WP), jnp.float32)],
        ),
        compiler_params=pltpu.CompilerParams(
            dimension_semantics=("parallel",),
            vmem_limit_bytes=32 * 1024 * 1024),
    )(x_folded, w1bd, b1f, w2band, b2f, w3bd, b3f)

    return out_folded.reshape(N, H, W, Cin)


def resblock_forward(x_nhwc, params):
    """Convenience wrapper; prefer hoisting pack_resblock_params per param set."""
    return resblock_forward_packed(
        x_nhwc, pack_resblock_params(params, x_nhwc.shape[2]))


# --------------------------------------------------------------------------
# deterministic parameter construction (BatchNorm folded, eval mode)
# --------------------------------------------------------------------------
def _fold_bn(w, b, gamma, beta, mean, var):
    s = gamma / jnp.sqrt(var + _BN_EPS)
    return w * s, (b - mean) * s + beta            # last dim of w == Cout


def make_params(key, c_in, planes):
    ks = jax.random.split(key, 18)
    c_out3 = planes * 4

    def bn(k0, k1, k2, k3, c):
        gamma = 1.0 + 0.1 * jax.random.normal(k0, (c,), jnp.float32)
        beta = 0.05 * jax.random.normal(k1, (c,), jnp.float32)
        mean = 0.1 * jax.random.normal(k2, (c,), jnp.float32)
        var = 0.5 + jnp.abs(jax.random.normal(k3, (c,), jnp.float32))
        return gamma, beta, mean, var

    w1 = 0.1 * jax.random.normal(ks[0], (c_in, planes), jnp.float32)
    b1 = 0.1 * jax.random.normal(ks[1], (planes,), jnp.float32)
    w1, b1 = _fold_bn(w1, b1, *bn(ks[2], ks[3], ks[4], ks[5], planes))

    w2 = 0.1 * jax.random.normal(ks[6], (3, 3, planes, planes), jnp.float32)
    b2 = 0.1 * jax.random.normal(ks[7], (planes,), jnp.float32)
    w2, b2 = _fold_bn(w2, b2, *bn(ks[8], ks[9], ks[10], ks[11], planes))

    w3 = 0.1 * jax.random.normal(ks[12], (planes, c_out3), jnp.float32)
    b3 = 0.1 * jax.random.normal(ks[13], (c_out3,), jnp.float32)
    w3, b3 = _fold_bn(w3, b3, *bn(ks[14], ks[15], ks[16], ks[17], c_out3))

    return (w1, b1, w2, b2, w3, b3)


# --------------------------------------------------------------------------
# pure-JAX references
# --------------------------------------------------------------------------
def _conv_nhwc(x, w_hwio, b, pad):
    y = lax.conv_general_dilated(
        x, w_hwio, window_strides=(1, 1),
        padding=[(pad, pad), (pad, pad)],
        dimension_numbers=('NHWC', 'HWIO', 'NHWC'),
        preferred_element_type=jnp.float32)
    return y + b.reshape(1, 1, 1, -1)


def resblock_ref_f32(x, params):
    w1, b1, w2, b2, w3, b3 = params
    h = jax.nn.relu(_conv_nhwc(x, w1.reshape(1, 1, *w1.shape), b1, 0))
    h = jax.nn.relu(_conv_nhwc(h, w2, b2, 1))
    h = _conv_nhwc(h, w3.reshape(1, 1, *w3.shape), b3, 0)
    return jax.nn.relu(h + x)


def resblock_ref_matched(x, params):
    """Reference with the same bf16 operand rounding the kernel uses."""
    bf = jnp.bfloat16
    w1, b1, w2, b2, w3, b3 = params
    h = jax.nn.relu(_conv_nhwc(x.astype(bf),
                               w1.reshape(1, 1, *w1.shape).astype(bf), b1, 0))
    h = jax.nn.relu(_conv_nhwc(h.astype(bf), w2.astype(bf), b2, 1))
    h = _conv_nhwc(h.astype(bf), w3.reshape(1, 1, *w3.shape).astype(bf), b3, 0)
    return jax.nn.relu(h + x)


# --------------------------------------------------------------------------
if __name__ == "__main__":
    key = jax.random.PRNGKey(0)
    k_x, k_p = jax.random.split(key)

    N, planes, H, W = 8, 8, 16, 16
    start_filts = planes * 4                 # identity residual: Cin == 4*planes

    # PyTorch-style NCHW input
    x_nchw = jax.random.normal(k_x, (N, start_filts, H, W), dtype=jnp.float32)
    params = make_params(k_p, start_filts, planes)

    # pack once per parameter set (hoisted out of the per-call path)
    packed = pack_resblock_params(params, W)

    x_nhwc = jnp.transpose(x_nchw, (0, 2, 3, 1))
    fwd = jax.jit(resblock_forward_packed)
    out_nhwc = fwd(x_nhwc, packed)
    jax.block_until_ready(out_nhwc)
    out_nchw = jnp.transpose(out_nhwc, (0, 3, 1, 2))

    ref_m = jnp.transpose(resblock_ref_matched(x_nhwc, params), (0, 3, 1, 2))
    ref_f = jnp.transpose(resblock_ref_f32(x_nhwc, params), (0, 3, 1, 2))
    err_m = float(jnp.max(jnp.abs(out_nchw - ref_m)))
    err_f = float(jnp.max(jnp.abs(out_nchw - ref_f)))
    assert err_m < 5e-3, f"mismatch vs bf16-matched reference: {err_m}"
    assert err_f < 1e-1, f"mismatch vs f32 reference: {err_f}"

    print("KERNEL_OK")
</pallas_src>

<mosaic_0001>
module attributes {stable_mosaic.version = 11 : i64} {
  func.func @kernel(%arg0: i32, %arg1: memref<8x16x512xf32, #tpu.memory_space<vmem>>, %arg2: memref<512x128xbf16, #tpu.memory_space<vmem>>, %arg3: memref<1x128xf32, #tpu.memory_space<vmem>>, %arg4: memref<3x128x128xbf16, #tpu.memory_space<vmem>>, %arg5: memref<1x128xf32, #tpu.memory_space<vmem>>, %arg6: memref<128x512xbf16, #tpu.memory_space<vmem>>, %arg7: memref<1x512xf32, #tpu.memory_space<vmem>>, %arg8: memref<8x16x512xf32, #tpu.memory_space<vmem>>, %arg9: memref<8x18x128xf32, #tpu.memory_space<vmem>>) attributes {dimension_semantics = [#tpu.dimension_semantics<parallel>], iteration_bounds = array<i64: 1>, scalar_prefetch = 0 : i64, scratch_operands = 1 : i64, tpu.core_type = #tpu.core_type<tc>, window_params = [{transform_indices = @transform_0, window_bounds = array<i64: 8, 16, 512>}, {pipeline_mode = #tpu.pipeline_mode<synchronous>, transform_indices = @transform_1, window_bounds = array<i64: 512, 128>}, {pipeline_mode = #tpu.pipeline_mode<synchronous>, transform_indices = @transform_2, window_bounds = array<i64: 1, 128>}, {pipeline_mode = #tpu.pipeline_mode<synchronous>, transform_indices = @transform_3, window_bounds = array<i64: 3, 128, 128>}, {pipeline_mode = #tpu.pipeline_mode<synchronous>, transform_indices = @transform_4, window_bounds = array<i64: 1, 128>}, {pipeline_mode = #tpu.pipeline_mode<synchronous>, transform_indices = @transform_5, window_bounds = array<i64: 128, 512>}, {pipeline_mode = #tpu.pipeline_mode<synchronous>, transform_indices = @transform_6, window_bounds = array<i64: 1, 512>}, {transform_indices = @transform_7, window_bounds = array<i64: 8, 16, 512>}]} {
    %c0 = arith.constant 0 : index
    %c0_0 = arith.constant 0 : index
    %c0_1 = arith.constant 0 : index
    %0 = vector.load %arg1[%c0, %c0_0, %c0_1] : memref<8x16x512xf32, #tpu.memory_space<vmem>>, vector<8x16x512xf32>
    %1 = vector.shape_cast %0 : vector<8x16x512xf32> to vector<128x512xf32>
    %2 = arith.truncf %1 : vector<128x512xf32> to vector<128x512xbf16>
    %c0_2 = arith.constant 0 : index
    %c0_3 = arith.constant 0 : index
    %3 = vector.load %arg2[%c0_2, %c0_3] : memref<512x128xbf16, #tpu.memory_space<vmem>>, vector<512x128xbf16>
    %cst = arith.constant dense<0.000000e+00> : vector<128x128xf32>
    %4 = tpu.matmul %2, %3, %cst {dimension_numbers = #tpu.dot_dimension_numbers<[1], [0], [0], [1], [0, 0, 1, 1], [], []>} : vector<128x512xbf16>, vector<512x128xbf16>, vector<128x128xf32> -> vector<128x128xf32>
    %c0_4 = arith.constant 0 : index
    %c0_5 = arith.constant 0 : index
    %5 = vector.load %arg3[%c0_4, %c0_5] : memref<1x128xf32, #tpu.memory_space<vmem>>, vector<1x128xf32>
    %6 = vector.broadcast %5 : vector<1x128xf32> to vector<128x128xf32>
    %7 = arith.addf %4, %6 : vector<128x128xf32>
    %cst_6 = arith.constant 0.000000e+00 : f32
    %8 = vector.broadcast %cst_6 : f32 to vector<128x128xf32>
    %9 = arith.maximumf %7, %8 : vector<128x128xf32>
    %10 = vector.shape_cast %9 : vector<128x128xf32> to vector<8x16x128xf32>
    %c0_7 = arith.constant 0 : index
    %c1 = arith.constant 1 : index
    %c0_8 = arith.constant 0 : index
    %11 = vector.load %arg9[%c0_7, %c1, %c0_8] : memref<8x18x128xf32, #tpu.memory_space<vmem>>, vector<8x16x128xf32>
    tpu.vector_store %arg9[%c0_7, %c1, %c0_8], %10 {strides = array<i32>} : memref<8x18x128xf32, #tpu.memory_space<vmem>>, vector<8x16x128xf32>,
    %cst_9 = arith.constant 0.000000e+00 : f32
    %12 = vector.broadcast %cst_9 : f32 to vector<8x1x128xf32>
    %c0_10 = arith.constant 0 : index
    %c0_11 = arith.constant 0 : index
    %c0_12 = arith.constant 0 : index
    %13 = vector.load %arg9[%c0_10, %c0_11, %c0_12] : memref<8x18x128xf32, #tpu.memory_space<vmem>>, vector<8x1x128xf32>
    tpu.vector_store %arg9[%c0_10, %c0_11, %c0_12], %12 {strides = array<i32>} : memref<8x18x128xf32, #tpu.memory_space<vmem>>, vector<8x1x128xf32>,
    %c0_13 = arith.constant 0 : index
    %c17 = arith.constant 17 : index
    %c0_14 = arith.constant 0 : index
    %14 = vector.load %arg9[%c0_13, %c17, %c0_14] : memref<8x18x128xf32, #tpu.memory_space<vmem>>, vector<8x1x128xf32>
    tpu.vector_store %arg9[%c0_13, %c17, %c0_14], %12 {strides = array<i32>} : memref<8x18x128xf32, #tpu.memory_space<vmem>>, vector<8x1x128xf32>,
    %c0_15 = arith.constant 0 : index
    %c0_16 = arith.constant 0 : index
    %c0_17 = arith.constant 0 : index
    %15 = vector.load %arg9[%c0_15, %c0_16, %c0_17] : memref<8x18x128xf32, #tpu.memory_space<vmem>>, vector<8x16x128xf32>
    %16 = vector.shape_cast %15 : vector<8x16x128xf32> to vector<128x128xf32>
    %17 = arith.truncf %16 : vector<128x128xf32> to vector<128x128xbf16>
    %c0_18 = arith.constant 0 : index
    %c0_19 = arith.constant 0 : index
    %c0_20 = arith.constant 0 : index
    %18 = vector.load %arg4[%c0_18, %c0_19, %c0_20] : memref<3x128x128xbf16, #tpu.memory_space<vmem>>, vector<1x128x128xbf16>
    %19 = vector.shape_cast %18 : vector<1x128x128xbf16> to vector<128x128xbf16>
    %cst_21 = arith.constant dense<0.000000e+00> : vector<128x128xf32>
    %20 = tpu.matmul %17, %19, %cst_21 {dimension_numbers = #tpu.dot_dimension_numbers<[1], [0], [0], [1], [0, 0, 1, 1], [], []>} : vector<128x128xbf16>, vector<128x128xbf16>, vector<128x128xf32> -> vector<128x128xf32>
    %c0_22 = arith.constant 0 : index
    %c1_23 = arith.constant 1 : index
    %c0_24 = arith.constant 0 : index
    %21 = vector.load %arg9[%c0_22, %c1_23, %c0_24] : memref<8x18x128xf32, #tpu.memory_space<vmem>>, vector<8x16x128xf32>
    %22 = vector.shape_cast %21 : vector<8x16x128xf32> to vector<128x128xf32>
    %23 = arith.truncf %22 : vector<128x128xf32> to vector<128x128xbf16>
    %c1_25 = arith.constant 1 : index
    %c0_26 = arith.constant 0 : index
    %c0_27 = arith.constant 0 : index
    %24 = vector.load %arg4[%c1_25, %c0_26, %c0_27] : memref<3x128x128xbf16, #tpu.memory_space<vmem>>, vector<1x128x128xbf16>
    %25 = vector.shape_cast %24 : vector<1x128x128xbf16> to vector<128x128xbf16>
    %cst_28 = arith.constant dense<0.000000e+00> : vector<128x128xf32>
    %26 = tpu.matmul %23, %25, %cst_28 {dimension_numbers = #tpu.dot_dimension_numbers<[1], [0], [0], [1], [0, 0, 1, 1], [], []>} : vector<128x128xbf16>, vector<128x128xbf16>, vector<128x128xf32> -> vector<128x128xf32>
    %27 = arith.addf %20, %26 : vector<128x128xf32>
    %c0_29 = arith.constant 0 : index
    %c2 = arith.constant 2 : index
    %c0_30 = arith.constant 0 : index
    %28 = vector.load %arg9[%c0_29, %c2, %c0_30] : memref<8x18x128xf32, #tpu.memory_space<vmem>>, vector<8x16x128xf32>
    %29 = vector.shape_cast %28 : vector<8x16x128xf32> to vector<128x128xf32>
    %30 = arith.truncf %29 : vector<128x128xf32> to vector<128x128xbf16>
    %c2_31 = arith.constant 2 : index
    %c0_32 = arith.constant 0 : index
    %c0_33 = arith.constant 0 : index
    %31 = vector.load %arg4[%c2_31, %c0_32, %c0_33] : memref<3x128x128xbf16, #tpu.memory_space<vmem>>, vector<1x128x128xbf16>
    %32 = vector.shape_cast %31 : vector<1x128x128xbf16> to vector<128x128xbf16>
    %cst_34 = arith.constant dense<0.000000e+00> : vector<128x128xf32>
    %33 = tpu.matmul %30, %32, %cst_34 {dimension_numbers = #tpu.dot_dimension_numbers<[1], [0], [0], [1], [0, 0, 1, 1], [], []>} : vector<128x128xbf16>, vector<128x128xbf16>, vector<128x128xf32> -> vector<128x128xf32>
    %34 = arith.addf %27, %33 : vector<128x128xf32>
    %c0_35 = arith.constant 0 : index
    %c0_36 = arith.constant 0 : index
    %35 = vector.load %arg5[%c0_35, %c0_36] : memref<1x128xf32, #tpu.memory_space<vmem>>, vector<1x128xf32>
    %36 = vector.broadcast %35 : vector<1x128xf32> to vector<128x128xf32>
    %37 = arith.addf %34, %36 : vector<128x128xf32>
    %cst_37 = arith.constant 0.000000e+00 : f32
    %38 = vector.broadcast %cst_37 : f32 to vector<128x128xf32>
    %39 = arith.maximumf %37, %38 : vector<128x128xf32>
    %40 = arith.truncf %39 : vector<128x128xf32> to vector<128x128xbf16>
    %c0_38 = arith.constant 0 : index
    %c0_39 = arith.constant 0 : index
    %41 = vector.load %arg6[%c0_38, %c0_39] : memref<128x512xbf16, #tpu.memory_space<vmem>>, vector<128x512xbf16>
    %cst_40 = arith.constant dense<0.000000e+00> : vector<128x512xf32>
    %42 = tpu.matmul %40, %41, %cst_40 {dimension_numbers = #tpu.dot_dimension_numbers<[1], [0], [0], [1], [0, 0, 1, 1], [], []>} : vector<128x128xbf16>, vector<128x512xbf16>, vector<128x512xf32> -> vector<128x512xf32>
    %c0_41 = arith.constant 0 : index
    %c0_42 = arith.constant 0 : index
    %43 = vector.load %arg7[%c0_41, %c0_42] : memref<1x512xf32, #tpu.memory_space<vmem>>, vector<1x512xf32>
    %44 = vector.broadcast %43 : vector<1x512xf32> to vector<128x512xf32>
    %45 = arith.addf %42, %44 : vector<128x512xf32>
    %c0_43 = arith.constant 0 : index
    %c0_44 = arith.constant 0 : index
    %c0_45 = arith.constant 0 : index
    %46 = vector.load %arg1[%c0_43, %c0_44, %c0_45] : memref<8x16x512xf32, #tpu.memory_space<vmem>>, vector<8x16x512xf32>
    %47 = vector.shape_cast %46 : vector<8x16x512xf32> to vector<128x512xf32>
    %48 = arith.addf %45, %47 : vector<128x512xf32>
    %cst_46 = arith.constant 0.000000e+00 : f32
    %49 = vector.broadcast %cst_46 : f32 to vector<128x512xf32>
    %50 = arith.maximumf %48, %49 : vector<128x512xf32>
    %51 = vector.shape_cast %50 : vector<128x512xf32> to vector<8x16x512xf32>
    %c0_47 = arith.constant 0 : index
    %c0_48 = arith.constant 0 : index
    %c0_49 = arith.constant 0 : index
    %52 = vector.load %arg8[%c0_47, %c0_48, %c0_49] : memref<8x16x512xf32, #tpu.memory_space<vmem>>, vector<8x16x512xf32>
    tpu.vector_store %arg8[%c0_47, %c0_48, %c0_49], %51 {strides = array<i32>} : memref<8x16x512xf32, #tpu.memory_space<vmem>>, vector<8x16x512xf32>,
    return
  }
  func.func @transform_0(%arg0: i32) -> (i32, i32, i32) {
    %c0_i32 = arith.constant 0 : i32
    %c0_i32_0 = arith.constant 0 : i32
    %c0_i32_1 = arith.constant 0 : i32
    return %arg0, %c0_i32, %c0_i32_0 : i32, i32, i32
  }
  func.func @transform_1(%arg0: i32) -> (i32, i32) {
    %c0_i32 = arith.constant 0 : i32
    %c0_i32_0 = arith.constant 0 : i32
    %c0_i32_1 = arith.constant 0 : i32
    return %c0_i32, %c0_i32_0 : i32, i32
  }
  func.func @transform_2(%arg0: i32) -> (i32, i32) {
    %c0_i32 = arith.constant 0 : i32
    %c0_i32_0 = arith.constant 0 : i32
    %c0_i32_1 = arith.constant 0 : i32
    return %c0_i32, %c0_i32_0 : i32, i32
  }
  func.func @transform_3(%arg0: i32) -> (i32, i32, i32) {
    %c0_i32 = arith.constant 0 : i32
    %c0_i32_0 = arith.constant 0 : i32
    %c0_i32_1 = arith.constant 0 : i32
    %c0_i32_2 = arith.constant 0 : i32
    return %c0_i32, %c0_i32_0, %c0_i32_1 : i32, i32, i32
  }
  func.func @transform_4(%arg0: i32) -> (i32, i32) {
    %c0_i32 = arith.constant 0 : i32
    %c0_i32_0 = arith.constant 0 : i32
    %c0_i32_1 = arith.constant 0 : i32
    return %c0_i32, %c0_i32_0 : i32, i32
  }
  func.func @transform_5(%arg0: i32) -> (i32, i32) {
    %c0_i32 = arith.constant 0 : i32
    %c0_i32_0 = arith.constant 0 : i32
    %c0_i32_1 = arith.constant 0 : i32
    return %c0_i32, %c0_i32_0 : i32, i32
  }
  func.func @transform_6(%arg0: i32) -> (i32, i32) {
    %c0_i32 = arith.constant 0 : i32
    %c0_i32_0 = arith.constant 0 : i32
    %c0_i32_1 = arith.constant 0 : i32
    return %c0_i32, %c0_i32_0 : i32, i32
  }
  func.func @transform_7(%arg0: i32) -> (i32, i32, i32) {
    %c0_i32 = arith.constant 0 : i32
    %c0_i32_0 = arith.constant 0 : i32
    %c0_i32_1 = arith.constant 0 : i32
    return %arg0, %c0_i32, %c0_i32_0 : i32, i32, i32
  }
}

</mosaic_0001>

<llo_original>
// kernel: resblock_forward_packed.1
$region0: #{resblock_forward_packed.1}
  #allocation0 [shape = 'u32[]', space=smem, size = 0x4, offset = 0x4, fixed_abs, tag = 'smem constant byte address 0x4 - core index']
  #allocation1 [shape = 'u32[144,128]{1,0:T(1,128)}', space=vmem, size = 0x12000, scoped, tag = 'internal scratch']
  #allocation2 [shape = 'f32[8,18,128]{2,1,0:T(8,128)}', space=vmem, size = 0x18000, scoped, tag = 'scratch operand']
  %s0 = inlined_call_operand.vmem [shape: f32[8,16,512], index: 0, kind: input, shape index: {}]
  %s1 = inlined_call_operand.vmem [shape: bf16[512,128], index: 1, kind: input, shape index: {}]
  %s2 = inlined_call_operand.vmem [shape: f32[1,128], index: 2, kind: input, shape index: {}]
  %s3 = inlined_call_operand.vmem [shape: bf16[3,128,128], index: 3, kind: input, shape index: {}]
  %s4 = inlined_call_operand.vmem [shape: f32[1,128], index: 4, kind: input, shape index: {}]
  %s5 = inlined_call_operand.vmem [shape: bf16[128,512], index: 5, kind: input, shape index: {}]
  %s6 = inlined_call_operand.vmem [shape: f32[1,512], index: 6, kind: input, shape index: {}]
  %s7 = inlined_call_operand.vmem [shape: f32[8,16,512], index: 7, kind: output, shape index: {}]
  %s8 = sld [smem:[#allocation0]]
  $region38: #{resblock_forward_packed.1} parent=0
    _
  %s10 = ssub.s32 1, %s8
  %s11 = scalar_select 0, %s10, %s8
  // Predicated region
  $region2: #{resblock_forward_packed.1} parent=0 // pred_check
    _
  $region3: #{resblock_forward_packed.1} parent=0 // pred_check_branch
    %13 = sbr.rel (0) target = $region5
  $region4: #{resblock_forward_packed.1} parent=0 // pred_region
    _
  $region5: #{resblock_forward_packed.1} parent=0 // pred_fallthru
    _
  // Predicated region
  $region6: #{resblock_forward_packed.1} parent=0 // pred_check
    _
  $region7: #{resblock_forward_packed.1} parent=0 // pred_check_branch
    %15 = sbr.rel (0) target = $region9
  $region8: #{resblock_forward_packed.1} parent=0 // pred_region
    _
  $region9: #{resblock_forward_packed.1} parent=0 // pred_fallthru
    _
  // Predicated region
  $region10: #{resblock_forward_packed.1} parent=0 // pred_check
    _
  $region11: #{resblock_forward_packed.1} parent=0 // pred_check_branch
    %17 = sbr.rel (0) target = $region13
  $region12: #{resblock_forward_packed.1} parent=0 // pred_region
    _
  $region13: #{resblock_forward_packed.1} parent=0 // pred_fallthru
    _
  // Predicated region
  $region14: #{resblock_forward_packed.1} parent=0 // pred_check
    _
  $region15: #{resblock_forward_packed.1} parent=0 // pred_check_branch
    %19 = sbr.rel (0) target = $region17
  $region16: #{resblock_forward_packed.1} parent=0 // pred_region
    _
  $region17: #{resblock_forward_packed.1} parent=0 // pred_fallthru
    _
  // Predicated region
  $region18: #{resblock_forward_packed.1} parent=0 // pred_check
    _
  $region19: #{resblock_forward_packed.1} parent=0 // pred_check_branch
    %21 = sbr.rel (0) target = $region21
  $region20: #{resblock_forward_packed.1} parent=0 // pred_region
    _
  $region21: #{resblock_forward_packed.1} parent=0 // pred_fallthru
    _
  // Predicated region
  $region22: #{resblock_forward_packed.1} parent=0 // pred_check
    _
  $region23: #{resblock_forward_packed.1} parent=0 // pred_check_branch
    %23 = sbr.rel (0) target = $region25
  $region24: #{resblock_forward_packed.1} parent=0 // pred_region
    _
  $region25: #{resblock_forward_packed.1} parent=0 // pred_fallthru
    _
  // Predicated region
  $region26: #{resblock_forward_packed.1} parent=0 // pred_check
    _
  $region27: #{resblock_forward_packed.1} parent=0 // pred_check_branch
    %25 = sbr.rel (0) target = $region29
  $region28: #{resblock_forward_packed.1} parent=0 // pred_region
    _
  $region29: #{resblock_forward_packed.1} parent=0 // pred_fallthru
    _
  %v27 = vld [vmem:[%s0] sm:$0xff]
  %v28 = vld [vmem:[%s0 + $0x8] sm:$0xff]
  %v29 = vld [vmem:[%s0 + $0x10] sm:$0xff]
  %v30 = vld [vmem:[%s0 + $0x18] sm:$0xff]
  %v31 = vld [vmem:[%s0 + $0x20] sm:$0xff]
  %v32 = vld [vmem:[%s0 + $0x28] sm:$0xff]
  %v33 = vld [vmem:[%s0 + $0x30] sm:$0xff]
  %v34 = vld [vmem:[%s0 + $0x38] sm:$0xff]
  %v35 = vld [vmem:[%s0 + $0x40] sm:$0xff]
  %v36 = vld [vmem:[%s0 + $0x48] sm:$0xff]
  %v37 = vld [vmem:[%s0 + $0x50] sm:$0xff]
  %v38 = vld [vmem:[%s0 + $0x58] sm:$0xff]
  %v39 = vld [vmem:[%s0 + $0x60] sm:$0xff]
  %v40 = vld [vmem:[%s0 + $0x68] sm:$0xff]
  %v41 = vld [vmem:[%s0 + $0x70] sm:$0xff]
  %v42 = vld [vmem:[%s0 + $0x78] sm:$0xff]
  %v43 = vld [vmem:[%s0 + $0x80] sm:$0xff]
  %v44 = vld [vmem:[%s0 + $0x88] sm:$0xff]
  %v45 = vld [vmem:[%s0 + $0x90] sm:$0xff]
  %v46 = vld [vmem:[%s0 + $0x98] sm:$0xff]
  %v47 = vld [vmem:[%s0 + $0xa0] sm:$0xff]
  %v48 = vld [vmem:[%s0 + $0xa8] sm:$0xff]
  %v49 = vld [vmem:[%s0 + $0xb0] sm:$0xff]
  %v50 = vld [vmem:[%s0 + $0xb8] sm:$0xff]
  %v51 = vld [vmem:[%s0 + $0xc0] sm:$0xff]
  %v52 = vld [vmem:[%s0 + $0xc8] sm:$0xff]
  %v53 = vld [vmem:[%s0 + $0xd0] sm:$0xff]
  %v54 = vld [vmem:[%s0 + $0xd8] sm:$0xff]
  %v55 = vld [vmem:[%s0 + $0xe0] sm:$0xff]
  %v56 = vld [vmem:[%s0 + $0xe8] sm:$0xff]
  %v57 = vld [vmem:[%s0 + $0xf0] sm:$0xff]
  %v58 = vld [vmem:[%s0 + $0xf8] sm:$0xff]
  %v59 = vld [vmem:[%s0 + $0x100] sm:$0xff]
  %v60 = vld [vmem:[%s0 + $0x108] sm:$0xff]
  %v61 = vld [vmem:[%s0 + $0x110] sm:$0xff]
  %v62 = vld [vmem:[%s0 + $0x118] sm:$0xff]
  %v63 = vld [vmem:[%s0 + $0x120] sm:$0xff]
  %v64 = vld [vmem:[%s0 + $0x128] sm:$0xff]
  %v65 = vld [vmem:[%s0 + $0x130] sm:$0xff]
  %v66 = vld [vmem:[%s0 + $0x138] sm:$0xff]
  %v67 = vld [vmem:[%s0 + $0x140] sm:$0xff]
  %v68 = vld [vmem:[%s0 + $0x148] sm:$0xff]
  %v69 = vld [vmem:[%s0 + $0x150] sm:$0xff]
  %v70 = vld [vmem:[%s0 + $0x158] sm:$0xff]
  %v71 = vld [vmem:[%s0 + $0x160] sm:$0xff]
  %v72 = vld [vmem:[%s0 + $0x168] sm:$0xff]
  %v73 = vld [vmem:[%s0 + $0x170] sm:$0xff]
  %v74 = vld [vmem:[%s0 + $0x178] sm:$0xff]
  %v75 = vld [vmem:[%s0 + $0x180] sm:$0xff]
  %v76 = vld [vmem:[%s0 + $0x188] sm:$0xff]
  %v77 = vld [vmem:[%s0 + $0x190] sm:$0xff]
  %v78 = vld [vmem:[%s0 + $0x198] sm:$0xff]
  %v79 = vld [vmem:[%s0 + $0x1a0] sm:$0xff]
  %v80 = vld [vmem:[%s0 + $0x1a8] sm:$0xff]
  %v81 = vld [vmem:[%s0 + $0x1b0] sm:$0xff]
  %v82 = vld [vmem:[%s0 + $0x1b8] sm:$0xff]
  %v83 = vld [vmem:[%s0 + $0x1c0] sm:$0xff]
  %v84 = vld [vmem:[%s0 + $0x1c8] sm:$0xff]
  %v85 = vld [vmem:[%s0 + $0x1d0] sm:$0xff]
  %v86 = vld [vmem:[%s0 + $0x1d8] sm:$0xff]
  %v87 = vld [vmem:[%s0 + $0x1e0] sm:$0xff]
  %v88 = vld [vmem:[%s0 + $0x1e8] sm:$0xff]
  %v89 = vld [vmem:[%s0 + $0x1f0] sm:$0xff]
  %v90 = vld [vmem:[%s0 + $0x1f8] sm:$0xff]
  %v91 = vpack.c.bf16 %v31, %v27
  %v92 = vpack.c.bf16 %v32, %v28
  %v93 = vpack.c.bf16 %v33, %v29
  %v94 = vpack.c.bf16 %v34, %v30
  %v95 = vpack.c.bf16 %v39, %v35
  %v96 = vpack.c.bf16 %v40, %v36
  %v97 = vpack.c.bf16 %v41, %v37
  %v98 = vpack.c.bf16 %v42, %v38
  %v99 = vpack.c.bf16 %v47, %v43
  %v100 = vpack.c.bf16 %v48, %v44
  %v101 = vpack.c.bf16 %v49, %v45
  %v102 = vpack.c.bf16 %v50, %v46
  %v103 = vpack.c.bf16 %v55, %v51
  %v104 = vpack.c.bf16 %v56, %v52
  %v105 = vpack.c.bf16 %v57, %v53
  %v106 = vpack.c.bf16 %v58, %v54
  %v107 = vpack.c.bf16 %v63, %v59
  %v108 = vpack.c.bf16 %v64, %v60
  %v109 = vpack.c.bf16 %v65, %v61
  %v110 = vpack.c.bf16 %v66, %v62
  %v111 = vpack.c.bf16 %v71, %v67
  %v112 = vpack.c.bf16 %v72, %v68
  %v113 = vpack.c.bf16 %v73, %v69
  %v114 = vpack.c.bf16 %v74, %v70
  %v115 = vpack.c.bf16 %v79, %v75
  %v116 = vpack.c.bf16 %v80, %v76
  %v117 = vpack.c.bf16 %v81, %v77
  %v118 = vpack.c.bf16 %v82, %v78
  %v119 = vpack.c.bf16 %v87, %v83
  %v120 = vpack.c.bf16 %v88, %v84
  %v121 = vpack.c.bf16 %v89, %v85
  %v122 = vpack.c.bf16 %v90, %v86
  %v123 = vld [vmem:[%s1] sm:$0xf]
  %v124 = vld [vmem:[%s1 + $0x4] sm:$0xf]
  %v125 = vld [vmem:[%s1 + $0x8] sm:$0xf]
  %v126 = vld [vmem:[%s1 + $0xc] sm:$0xf]
  %v127 = vld [vmem:[%s1 + $0x10] sm:$0xf]
  %v128 = vld [vmem:[%s1 + $0x14] sm:$0xf]
  %v129 = vld [vmem:[%s1 + $0x18] sm:$0xf]
  %v130 = vld [vmem:[%s1 + $0x1c] sm:$0xf]
  %v131 = vld [vmem:[%s1 + $0x20] sm:$0xf]
  %v132 = vld [vmem:[%s1 + $0x24] sm:$0xf]
  %v133 = vld [vmem:[%s1 + $0x28] sm:$0xf]
  %v134 = vld [vmem:[%s1 + $0x2c] sm:$0xf]
  %v135 = vld [vmem:[%s1 + $0x30] sm:$0xf]
  %v136 = vld [vmem:[%s1 + $0x34] sm:$0xf]
  %v137 = vld [vmem:[%s1 + $0x38] sm:$0xf]
  %v138 = vld [vmem:[%s1 + $0x3c] sm:$0xf]
  %v139 = vld [vmem:[%s1 + $0x40] sm:$0xf]
  %v140 = vld [vmem:[%s1 + $0x44] sm:$0xf]
  %v141 = vld [vmem:[%s1 + $0x48] sm:$0xf]
  %v142 = vld [vmem:[%s1 + $0x4c] sm:$0xf]
  %v143 = vld [vmem:[%s1 + $0x50] sm:$0xf]
  %v144 = vld [vmem:[%s1 + $0x54] sm:$0xf]
  %v145 = vld [vmem:[%s1 + $0x58] sm:$0xf]
  %v146 = vld [vmem:[%s1 + $0x5c] sm:$0xf]
  %v147 = vld [vmem:[%s1 + $0x60] sm:$0xf]
  %v148 = vld [vmem:[%s1 + $0x64] sm:$0xf]
  %v149 = vld [vmem:[%s1 + $0x68] sm:$0xf]
  %v150 = vld [vmem:[%s1 + $0x6c] sm:$0xf]
  %v151 = vld [vmem:[%s1 + $0x70] sm:$0xf]
  %v152 = vld [vmem:[%s1 + $0x74] sm:$0xf]
  %v153 = vld [vmem:[%s1 + $0x78] sm:$0xf]
  %v154 = vld [vmem:[%s1 + $0x7c] sm:$0xf]
  %v155 = vld [vmem:[%s1 + $0x80] sm:$0xf]
  %v156 = vld [vmem:[%s1 + $0x84] sm:$0xf]
  %v157 = vld [vmem:[%s1 + $0x88] sm:$0xf]
  %v158 = vld [vmem:[%s1 + $0x8c] sm:$0xf]
  %v159 = vld [vmem:[%s1 + $0x90] sm:$0xf]
  %v160 = vld [vmem:[%s1 + $0x94] sm:$0xf]
  %v161 = vld [vmem:[%s1 + $0x98] sm:$0xf]
  %v162 = vld [vmem:[%s1 + $0x9c] sm:$0xf]
  %v163 = vld [vmem:[%s1 + $0xa0] sm:$0xf]
  %v164 = vld [vmem:[%s1 + $0xa4] sm:$0xf]
  %v165 = vld [vmem:[%s1 + $0xa8] sm:$0xf]
  %v166 = vld [vmem:[%s1 + $0xac] sm:$0xf]
  %v167 = vld [vmem:[%s1 + $0xb0] sm:$0xf]
  %v168 = vld [vmem:[%s1 + $0xb4] sm:$0xf]
  %v169 = vld [vmem:[%s1 + $0xb8] sm:$0xf]
  %v170 = vld [vmem:[%s1 + $0xbc] sm:$0xf]
  %v171 = vld [vmem:[%s1 + $0xc0] sm:$0xf]
  %v172 = vld [vmem:[%s1 + $0xc4] sm:$0xf]
  %v173 = vld [vmem:[%s1 + $0xc8] sm:$0xf]
  %v174 = vld [vmem:[%s1 + $0xcc] sm:$0xf]
  %v175 = vld [vmem:[%s1 + $0xd0] sm:$0xf]
  %v176 = vld [vmem:[%s1 + $0xd4] sm:$0xf]
  %v177 = vld [vmem:[%s1 + $0xd8] sm:$0xf]
  %v178 = vld [vmem:[%s1 + $0xdc] sm:$0xf]
  %v179 = vld [vmem:[%s1 + $0xe0] sm:$0xf]
  %v180 = vld [vmem:[%s1 + $0xe4] sm:$0xf]
  %v181 = vld [vmem:[%s1 + $0xe8] sm:$0xf]
  %v182 = vld [vmem:[%s1 + $0xec] sm:$0xf]
  %v183 = vld [vmem:[%s1 + $0xf0] sm:$0xf]
  %v184 = vld [vmem:[%s1 + $0xf4] sm:$0xf]
  %v185 = vld [vmem:[%s1 + $0xf8] sm:$0xf]
  %v186 = vld [vmem:[%s1 + $0xfc] sm:$0xf]
  %v187 = vld [vmem:[%s2] sm:$0x1]
  %v189 = vlaneseq
  %v190 = vshrl.u32 %v189, 7
  %v191 = vsub.s32 0, %v190
  %v192 = vrot.slane %v187, %v191
  %v258 = vunpack.c.l.b16 %v123
  %v259 = vunpack.c.l.b16 %v124
  %v260 = vunpack.c.l.b16 %v125
  %v261 = vunpack.c.l.b16 %v126
  %v262 = vunpack.c.l.b16 %v127
  %v263 = vunpack.c.l.b16 %v128
  %v264 = vunpack.c.l.b16 %v129
  %v265 = vunpack.c.l.b16 %v130
  %v266 = vunpack.c.l.b16 %v131
  %v267 = vunpack.c.l.b16 %v132
  %v268 = vunpack.c.l.b16 %v133
  %v269 = vunpack.c.l.b16 %v134
  %v270 = vunpack.c.l.b16 %v135
  %v271 = vunpack.c.l.b16 %v136
  %v272 = vunpack.c.l.b16 %v137
  %v273 = vunpack.c.l.b16 %v138
  %v274 = vunpack.c.l.b16 %v139
  %v275 = vunpack.c.l.b16 %v140
  %v276 = vunpack.c.l.b16 %v141
  %v277 = vunpack.c.l.b16 %v142
  %v278 = vunpack.c.l.b16 %v143
  %v279 = vunpack.c.l.b16 %v144
  %v280 = vunpack.c.l.b16 %v145
  %v281 = vunpack.c.l.b16 %v146
  %v282 = vunpack.c.l.b16 %v147
  %v283 = vunpack.c.l.b16 %v148
  %v284 = vunpack.c.l.b16 %v149
  %v285 = vunpack.c.l.b16 %v150
  %v286 = vunpack.c.l.b16 %v151
  %v287 = vunpack.c.l.b16 %v152
  %v288 = vunpack.c.l.b16 %v153
  %v289 = vunpack.c.l.b16 %v154
  %v290 = vunpack.c.l.b16 %v155
  %v291 = vunpack.c.l.b16 %v156
  %v292 = vunpack.c.l.b16 %v157
  %v293 = vunpack.c.l.b16 %v158
  %v294 = vunpack.c.l.b16 %v159
  %v295 = vunpack.c.l.b16 %v160
  %v296 = vunpack.c.l.b16 %v161
  %v297 = vunpack.c.l.b16 %v162
  %v298 = vunpack.c.l.b16 %v163
  %v299 = vunpack.c.l.b16 %v164
  %v300 = vunpack.c.l.b16 %v165
  %v301 = vunpack.c.l.b16 %v166
  %v302 = vunpack.c.l.b16 %v167
  %v303 = vunpack.c.l.b16 %v168
  %v304 = vunpack.c.l.b16 %v169
  %v305 = vunpack.c.l.b16 %v170
  %v306 = vunpack.c.l.b16 %v171
  %v307 = vunpack.c.l.b16 %v172
  %v308 = vunpack.c.l.b16 %v173
  %v309 = vunpack.c.l.b16 %v174
  %v310 = vunpack.c.l.b16 %v175
  %v311 = vunpack.c.l.b16 %v176
  %v312 = vunpack.c.l.b16 %v177
  %v313 = vunpack.c.l.b16 %v178
  %v314 = vunpack.c.l.b16 %v179
  %v315 = vunpack.c.l.b16 %v180
  %v316 = vunpack.c.l.b16 %v181
  %v317 = vunpack.c.l.b16 %v182
  %v318 = vunpack.c.l.b16 %v183
  %v319 = vunpack.c.l.b16 %v184
  %v320 = vunpack.c.l.b16 %v185
  %v321 = vunpack.c.l.b16 %v186
  %v322 = vpack.c.b16 %v259, %v258
  %v323 = vpack.c.b16 %v261, %v260
  %v324 = vpack.c.b16 %v263, %v262
  %v325 = vpack.c.b16 %v265, %v264
  %v326 = vpack.c.b16 %v267, %v266
  %v327 = vpack.c.b16 %v269, %v268
  %v328 = vpack.c.b16 %v271, %v270
  %v329 = vpack.c.b16 %v273, %v272
  %v330 = vpack.c.b16 %v275, %v274
  %v331 = vpack.c.b16 %v277, %v276
  %v332 = vpack.c.b16 %v279, %v278
  %v333 = vpack.c.b16 %v281, %v280
  %v334 = vpack.c.b16 %v283, %v282
  %v335 = vpack.c.b16 %v285, %v284
  %v336 = vpack.c.b16 %v287, %v286
  %v337 = vpack.c.b16 %v289, %v288
  %v338 = vpack.c.b16 %v291, %v290
  %v339 = vpack.c.b16 %v293, %v292
  %v340 = vpack.c.b16 %v295, %v294
  %v341 = vpack.c.b16 %v297, %v296
  %v342 = vpack.c.b16 %v299, %v298
  %v343 = vpack.c.b16 %v301, %v300
  %v344 = vpack.c.b16 %v303, %v302
  %v345 = vpack.c.b16 %v305, %v304
  %v346 = vpack.c.b16 %v307, %v306
  %v347 = vpack.c.b16 %v309, %v308
  %v348 = vpack.c.b16 %v311, %v310
  %v349 = vpack.c.b16 %v313, %v312
  %v350 = vpack.c.b16 %v315, %v314
  %v351 = vpack.c.b16 %v317, %v316
  %v352 = vpack.c.b16 %v319, %v318
  %v353 = vpack.c.b16 %v321, %v320
  %386 = vmatprep.subr.bf16.mxu0 0
  %387 = vmatpush1.bf16.msra.mxu0 %v329
  %388 = vmatprep.subr.bf16.mxu0 0
  %389 = vmatpush1.bf16.msra.mxu0 %v328
  %390 = vmatprep.subr.bf16.mxu0 0
  %391 = vmatpush1.bf16.msra.mxu0 %v327
  %392 = vmatprep.subr.bf16.mxu0 0
  %393 = vmatpush1.bf16.msra.mxu0 %v326
  %394 = vmatprep.subr.bf16.mxu0 0
  %395 = vmatpush1.bf16.msra.mxu0 %v325
  %396 = vmatprep.subr.bf16.mxu0 0
  %397 = vmatpush1.bf16.msra.mxu0 %v324
  %398 = vmatprep.subr.bf16.mxu0 0
  %399 = vmatpush1.bf16.msra.mxu0 %v323
  %400 = vmatprep.subr.bf16.mxu0 0
  %401 = vmatpush1.bf16.msra.mxu0 %v322
  %402 = vmatprep.subr.bf16.mxu0 0
  %403 = vmatpush2.bf16.msra.mxu0 %v337
  %404 = vmatprep.subr.bf16.mxu0 0
  %405 = vmatpush2.bf16.msra.mxu0 %v336
  %406 = vmatprep.subr.bf16.mxu0 0
  %407 = vmatpush2.bf16.msra.mxu0 %v335
  %408 = vmatprep.subr.bf16.mxu0 0
  %409 = vmatpush2.bf16.msra.mxu0 %v334
  %410 = vmatprep.subr.bf16.mxu0 0
  %411 = vmatpush2.bf16.msra.mxu0 %v333
  %412 = vmatprep.subr.bf16.mxu0 0
  %413 = vmatpush2.bf16.msra.mxu0 %v332
  %414 = vmatprep.subr.bf16.mxu0 0
  %415 = vmatpush2.bf16.msra.mxu0 %v331
  %416 = vmatprep.subr.bf16.mxu0 0
  %417 = vmatpush2.bf16.msra.mxu0 %v330
  %418 = vmatprep.mubr.bf16.mxu0 %v92
  %419 = vmatmul.mubr.bf16.gmra.mxu0 %v91
  %v420 = vpop.f32.mrf.mxu0
  %v421 = vadd.f32 %v192, %v420
  %v422 = vpop.f32.mrf.mxu0
  %v423 = vpop.f32.mrf.mxu0
  %v424 = vadd.f32 %v192, %v423
  %v425 = vpop.f32.mrf.mxu0
  %426 = vmatprep.mubr.bf16.mxu0 %v96
  %427 = vmatmul.mubr.bf16.gmra.mxu0 %v95
  %v428 = vpop.f32.mrf.mxu0
  %v429 = vadd.f32 %v192, %v428
  %v430 = vpop.f32.mrf.mxu0
  %v431 = vpop.f32.mrf.mxu0
  %v432 = vadd.f32 %v192, %v431
  %v433 = vpop.f32.mrf.mxu0
  %434 = vmatprep.mubr.bf16.mxu0 %v100
  %435 = vmatmul.mubr.bf16.gmra.mxu0 %v99
  %v436 = vpop.f32.mrf.mxu0
  %v437 = vadd.f32 %v192, %v436
  %v438 = vpop.f32.mrf.mxu0
  %v439 = vpop.f32.mrf.mxu0
  %v440 = vadd.f32 %v192, %v439
  %v441 = vpop.f32.mrf.mxu0
  %442 = vmatprep.mubr.bf16.mxu0 %v104
  %443 = vmatmul.mubr.bf16.gmra.mxu0 %v103
  %v444 = vpop.f32.mrf.mxu0
  %v445 = vadd.f32 %v192, %v444
  %v446 = vpop.f32.mrf.mxu0
  %v447 = vpop.f32.mrf.mxu0
  %v448 = vadd.f32 %v192, %v447
  %v449 = vpop.f32.mrf.mxu0
  %450 = vmatprep.mubr.bf16.mxu0 %v108
  %451 = vmatmul.mubr.bf16.gmra.mxu0 %v107
  %v452 = vpop.f32.mrf.mxu0
  %v453 = vadd.f32 %v192, %v452
  %v454 = vpop.f32.mrf.mxu0
  %v455 = vpop.f32.mrf.mxu0
  %v456 = vadd.f32 %v192, %v455
  %v457 = vpop.f32.mrf.mxu0
  %458 = vmatprep.mubr.bf16.mxu0 %v112
  %459 = vmatmul.mubr.bf16.gmra.mxu0 %v111
  %v460 = vpop.f32.mrf.mxu0
  %v461 = vadd.f32 %v192, %v460
  %v462 = vpop.f32.mrf.mxu0
  %v463 = vpop.f32.mrf.mxu0
  %v464 = vadd.f32 %v192, %v463
  %v465 = vpop.f32.mrf.mxu0
  %466 = vmatprep.mubr.bf16.mxu0 %v116
  %467 = vmatmul.mubr.bf16.gmra.mxu0 %v115
  %v468 = vpop.f32.mrf.mxu0
  %v469 = vadd.f32 %v192, %v468
  %v470 = vpop.f32.mrf.mxu0
  %v471 = vpop.f32.mrf.mxu0
  %v472 = vadd.f32 %v192, %v471
  %v473 = vpop.f32.mrf.mxu0
  %474 = vmatprep.mubr.bf16.mxu0 %v120
  %475 = vmatmul.mubr.bf16.gmra.mxu0 %v119
  %v476 = vpop.f32.mrf.mxu0
  %v477 = vadd.f32 %v192, %v476
  %v478 = vpop.f32.mrf.mxu0
  %v479 = vpop.f32.mrf.mxu0
  %v480 = vadd.f32 %v192, %v479
  %v481 = vpop.f32.mrf.mxu0
  %482 = vdwg.mxu0
  %483 = vmatprep.subr.bf16.mxu0 0
  %484 = vmatpush1.bf16.msra.mxu0 %v345
  %485 = vmatprep.subr.bf16.mxu0 0
  %486 = vmatpush1.bf16.msra.mxu0 %v344
  %487 = vmatprep.subr.bf16.mxu0 0
  %488 = vmatpush1.bf16.msra.mxu0 %v343
  %489 = vmatprep.subr.bf16.mxu0 0
  %490 = vmatpush1.bf16.msra.mxu0 %v342
  %491 = vmatprep.subr.bf16.mxu0 0
  %492 = vmatpush1.bf16.msra.mxu0 %v341
  %493 = vmatprep.subr.bf16.mxu0 0
  %494 = vmatpush1.bf16.msra.mxu0 %v340
  %495 = vmatprep.subr.bf16.mxu0 0
  %496 = vmatpush1.bf16.msra.mxu0 %v339
  %497 = vmatprep.subr.bf16.mxu0 0
  %498 = vmatpush1.bf16.msra.mxu0 %v338
  %499 = vmatprep.subr.bf16.mxu0 0
  %500 = vmatpush2.bf16.msra.mxu0 %v353
  %501 = vmatprep.subr.bf16.mxu0 0
  %502 = vmatpush2.bf16.msra.mxu0 %v352
  %503 = vmatprep.subr.bf16.mxu0 0
  %504 = vmatpush2.bf16.msra.mxu0 %v351
  %505 = vmatprep.subr.bf16.mxu0 0
  %506 = vmatpush2.bf16.msra.mxu0 %v350
  %507 = vmatprep.subr.bf16.mxu0 0
  %508 = vmatpush2.bf16.msra.mxu0 %v349
  %509 = vmatprep.subr.bf16.mxu0 0
  %510 = vmatpush2.bf16.msra.mxu0 %v348
  %511 = vmatprep.subr.bf16.mxu0 0
  %512 = vmatpush2.bf16.msra.mxu0 %v347
  %513 = vmatprep.subr.bf16.mxu0 0
  %514 = vmatpush2.bf16.msra.mxu0 %v346
  %515 = vmatprep.mubr.bf16.mxu0 %v94
  %516 = vmatmul.mubr.bf16.gmra.mxu0 %v93
  %v517 = vpop.f32.mrf.mxu0
  %v518 = vadd.f32 %v421, %v517
  %v519 = vpop.f32.mrf.mxu0
  %v520 = vpop.f32.mrf.mxu0
  %v521 = vadd.f32 %v424, %v520
  %v522 = vpop.f32.mrf.mxu0
  %523 = vmatprep.mubr.bf16.mxu0 %v98
  %524 = vmatmul.mubr.bf16.gmra.mxu0 %v97
  %v525 = vpop.f32.mrf.mxu0
  %v526 = vadd.f32 %v429, %v525
  %v527 = vpop.f32.mrf.mxu0
  %v528 = vpop.f32.mrf.mxu0
  %v529 = vadd.f32 %v432, %v528
  %v530 = vpop.f32.mrf.mxu0
  %531 = vmatprep.mubr.bf16.mxu0 %v102
  %532 = vmatmul.mubr.bf16.gmra.mxu0 %v101
  %v533 = vpop.f32.mrf.mxu0
  %v534 = vadd.f32 %v437, %v533
  %v535 = vpop.f32.mrf.mxu0
  %v536 = vpop.f32.mrf.mxu0
  %v537 = vadd.f32 %v440, %v536
  %v538 = vpop.f32.mrf.mxu0
  %539 = vmatprep.mubr.bf16.mxu0 %v106
  %540 = vmatmul.mubr.bf16.gmra.mxu0 %v105
  %v541 = vpop.f32.mrf.mxu0
  %v542 = vadd.f32 %v445, %v541
  %v543 = vpop.f32.mrf.mxu0
  %v544 = vpop.f32.mrf.mxu0
  %v545 = vadd.f32 %v448, %v544
  %v546 = vpop.f32.mrf.mxu0
  %547 = vmatprep.mubr.bf16.mxu0 %v110
  %548 = vmatmul.mubr.bf16.gmra.mxu0 %v109
  %v549 = vpop.f32.mrf.mxu0
  %v550 = vadd.f32 %v453, %v549
  %v551 = vpop.f32.mrf.mxu0
  %v552 = vpop.f32.mrf.mxu0
  %v553 = vadd.f32 %v456, %v552
  %v554 = vpop.f32.mrf.mxu0
  %555 = vmatprep.mubr.bf16.mxu0 %v114
  %556 = vmatmul.mubr.bf16.gmra.mxu0 %v113
  %v557 = vpop.f32.mrf.mxu0
  %v558 = vadd.f32 %v461, %v557
  %v559 = vpop.f32.mrf.mxu0
  %v560 = vpop.f32.mrf.mxu0
  %v561 = vadd.f32 %v464, %v560
  %v562 = vpop.f32.mrf.mxu0
  %563 = vmatprep.mubr.bf16.mxu0 %v118
  %564 = vmatmul.mubr.bf16.gmra.mxu0 %v117
  %v565 = vpop.f32.mrf.mxu0
  %v566 = vadd.f32 %v469, %v565
  %v567 = vpop.f32.mrf.mxu0
  %v568 = vpop.f32.mrf.mxu0
  %v569 = vadd.f32 %v472, %v568
  %v570 = vpop.f32.mrf.mxu0
  %571 = vmatprep.mubr.bf16.mxu0 %v122
  %572 = vmatmul.mubr.bf16.gmra.mxu0 %v121
  %v573 = vpop.f32.mrf.mxu0
  %v574 = vadd.f32 %v477, %v573
  %v575 = vpop.f32.mrf.mxu0
  %v576 = vpop.f32.mrf.mxu0
  %v577 = vadd.f32 %v480, %v576
  %v578 = vpop.f32.mrf.mxu0
  %579 = vdwg.mxu0
  %v580 = vmax.f32 %v518, 0.0
  %v581 = vmax.f32 %v521, 0.0
  %v582 = vmax.f32 %v526, 0.0
  %v583 = vmax.f32 %v529, 0.0
  %v584 = vmax.f32 %v534, 0.0
  %v585 = vmax.f32 %v537, 0.0
  %v586 = vmax.f32 %v542, 0.0
  %v587 = vmax.f32 %v545, 0.0
  %v588 = vmax.f32 %v550, 0.0
  %v589 = vmax.f32 %v553, 0.0
  %v590 = vmax.f32 %v558, 0.0
  %v591 = vmax.f32 %v561, 0.0
  %v592 = vmax.f32 %v566, 0.0
  %v593 = vmax.f32 %v569, 0.0
  %v594 = vmax.f32 %v574, 0.0
  %v595 = vmax.f32 %v577, 0.0
  %596 = vst [vmem:[#allocation2 + $0x1] sm:$0xff] %v580
  %597 = vst [vmem:[#allocation2 + $0x9] sm:$0xff] %v581
  %598 = vst [vmem:[#allocation2 + $0x19] sm:$0xff] %v582
  %599 = vst [vmem:[#allocation2 + $0x21] sm:$0xff] %v583
  %600 = vst [vmem:[#allocation2 + $0x31] sm:$0xff] %v584
  %601 = vst [vmem:[#allocation2 + $0x39] sm:$0xff] %v585
  %602 = vst [vmem:[#allocation2 + $0x49] sm:$0xff] %v586
  %603 = vst [vmem:[#allocation2 + $0x51] sm:$0xff] %v587
  %604 = vst [vmem:[#allocation2 + $0x61] sm:$0xff] %v588
  %605 = vst [vmem:[#allocation2 + $0x69] sm:$0xff] %v589
  %606 = vst [vmem:[#allocation2 + $0x79] sm:$0xff] %v590
  %607 = vst [vmem:[#allocation2 + $0x81] sm:$0xff] %v591
  %608 = vst [vmem:[#allocation2 + $0x91] sm:$0xff] %v592
  %609 = vst [vmem:[#allocation2 + $0x99] sm:$0xff] %v593
  %610 = vst [vmem:[#allocation2 + $0xa9] sm:$0xff] %v594
  %611 = vst [vmem:[#allocation2 + $0xb1] sm:$0xff] %v595
  %612 = vst [vmem:[#allocation2] sm:$0x1] 0.0
  %613 = vst [vmem:[#allocation2 + $0x18] sm:$0x1] 0.0
  %614 = vst [vmem:[#allocation2 + $0x30] sm:$0x1] 0.0
  %615 = vst [vmem:[#allocation2 + $0x48] sm:$0x1] 0.0
  %616 = vst [vmem:[#allocation2 + $0x60] sm:$0x1] 0.0
  %617 = vst [vmem:[#allocation2 + $0x78] sm:$0x1] 0.0
  %618 = vst [vmem:[#allocation2 + $0x90] sm:$0x1] 0.0
  %619 = vst [vmem:[#allocation2 + $0xa8] sm:$0x1] 0.0
  %620 = vst [vmem:[#allocation2 + $0x11] sm:$0x1] 0.0
  %621 = vst [vmem:[#allocation2 + $0x29] sm:$0x1] 0.0
  %622 = vst [vmem:[#allocation2 + $0x41] sm:$0x1] 0.0
  %623 = vst [vmem:[#allocation2 + $0x59] sm:$0x1] 0.0
  %624 = vst [vmem:[#allocation2 + $0x71] sm:$0x1] 0.0
  %625 = vst [vmem:[#allocation2 + $0x89] sm:$0x1] 0.0
  %626 = vst [vmem:[#allocation2 + $0xa1] sm:$0x1] 0.0
  %627 = vst [vmem:[#allocation2 + $0xb9] sm:$0x1] 0.0
  %v628 = vld [vmem:[#allocation2] sm:$0xff]
  %v629 = vld [vmem:[#allocation2 + $0x8] sm:$0xff]
  %v630 = vld [vmem:[#allocation2 + $0x18] sm:$0xff]
  %v631 = vld [vmem:[#allocation2 + $0x20] sm:$0xff]
  %v632 = vld [vmem:[#allocation2 + $0x30] sm:$0xff]
  %v633 = vld [vmem:[#allocation2 + $0x38] sm:$0xff]
  %v634 = vld [vmem:[#allocation2 + $0x48] sm:$0xff]
  %v635 = vld [vmem:[#allocation2 + $0x50] sm:$0xff]
  %v636 = vld [vmem:[#allocation2 + $0x60] sm:$0xff]
  %v637 = vld [vmem:[#allocation2 + $0x68] sm:$0xff]
  %v638 = vld [vmem:[#allocation2 + $0x78] sm:$0xff]
  %v639 = vld [vmem:[#allocation2 + $0x80] sm:$0xff]
  %v640 = vld [vmem:[#allocation2 + $0x90] sm:$0xff]
  %v641 = vld [vmem:[#allocation2 + $0x98] sm:$0xff]
  %v642 = vld [vmem:[#allocation2 + $0xa8] sm:$0xff]
  %v643 = vld [vmem:[#allocation2 + $0xb0] sm:$0xff]
  %v644 = vpack.c.bf16 %v629, %v628
  %v645 = vpack.c.bf16 %v631, %v630
  %v646 = vpack.c.bf16 %v633, %v632
  %v647 = vpack.c.bf16 %v635, %v634
  %v648 = vpack.c.bf16 %v637, %v636
  %v649 = vpack.c.bf16 %v639, %v638
  %v650 = vpack.c.bf16 %v641, %v640
  %v651 = vpack.c.bf16 %v643, %v642
  %v652 = vld [vmem:[%s3] sm:$0xf]
  %v653 = vld [vmem:[%s3 + $0x4] sm:$0xf]
  %v654 = vld [vmem:[%s3 + $0x8] sm:$0xf]
  %v655 = vld [vmem:[%s3 + $0xc] sm:$0xf]
  %v656 = vld [vmem:[%s3 + $0x10] sm:$0xf]
  %v657 = vld [vmem:[%s3 + $0x14] sm:$0xf]
  %v658 = vld [vmem:[%s3 + $0x18] sm:$0xf]
  %v659 = vld [vmem:[%s3 + $0x1c] sm:$0xf]
  %v660 = vld [vmem:[%s3 + $0x20] sm:$0xf]
  %v661 = vld [vmem:[%s3 + $0x24] sm:$0xf]
  %v662 = vld [vmem:[%s3 + $0x28] sm:$0xf]
  %v663 = vld [vmem:[%s3 + $0x2c] sm:$0xf]
  %v664 = vld [vmem:[%s3 + $0x30] sm:$0xf]
  %v665 = vld [vmem:[%s3 + $0x34] sm:$0xf]
  %v666 = vld [vmem:[%s3 + $0x38] sm:$0xf]
  %v667 = vld [vmem:[%s3 + $0x3c] sm:$0xf]
  %v668 = vld [vmem:[#allocation2 + $0x1] sm:$0xff]
  %v669 = vld [vmem:[#allocation2 + $0x9] sm:$0xff]
  %v670 = vld [vmem:[#allocation2 + $0x19] sm:$0xff]
  %v671 = vld [vmem:[#allocation2 + $0x21] sm:$0xff]
  %v672 = vld [vmem:[#allocation2 + $0x31] sm:$0xff]
  %v673 = vld [vmem:[#allocation2 + $0x39] sm:$0xff]
  %v674 = vld [vmem:[#allocation2 + $0x49] sm:$0xff]
  %v675 = vld [vmem:[#allocation2 + $0x51] sm:$0xff]
  %v676 = vld [vmem:[#allocation2 + $0x61] sm:$0xff]
  %v677 = vld [vmem:[#allocation2 + $0x69] sm:$0xff]
  %v678 = vld [vmem:[#allocation2 + $0x79] sm:$0xff]
  %v679 = vld [vmem:[#allocation2 + $0x81] sm:$0xff]
  %v680 = vld [vmem:[#allocation2 + $0x91] sm:$0xff]
  %v681 = vld [vmem:[#allocation2 + $0x99] sm:$0xff]
  %v682 = vld [vmem:[#allocation2 + $0xa9] sm:$0xff]
  %v683 = vld [vmem:[#allocation2 + $0xb1] sm:$0xff]
  %v684 = vpack.c.bf16 %v669, %v668
  %v685 = vpack.c.bf16 %v671, %v670
  %v686 = vpack.c.bf16 %v673, %v672
  %v687 = vpack.c.bf16 %v675, %v674
  %v688 = vpack.c.bf16 %v677, %v676
  %v689 = vpack.c.bf16 %v679, %v678
  %v690 = vpack.c.bf16 %v681, %v680
  %v691 = vpack.c.bf16 %v683, %v682
  %s692 = scalar_lea.vmem %s3, 64
  %v693 = vld [vmem:[%s692] sm:$0xf]
  %v694 = vld [vmem:[%s692 + $0x4] sm:$0xf]
  %v695 = vld [vmem:[%s692 + $0x8] sm:$0xf]
  %v696 = vld [vmem:[%s692 + $0xc] sm:$0xf]
  %v697 = vld [vmem:[%s692 + $0x10] sm:$0xf]
  %v698 = vld [vmem:[%s692 + $0x14] sm:$0xf]
  %v699 = vld [vmem:[%s692 + $0x18] sm:$0xf]
  %v700 = vld [vmem:[%s692 + $0x1c] sm:$0xf]
  %v701 = vld [vmem:[%s692 + $0x20] sm:$0xf]
  %v702 = vld [vmem:[%s692 + $0x24] sm:$0xf]
  %v703 = vld [vmem:[%s692 + $0x28] sm:$0xf]
  %v704 = vld [vmem:[%s692 + $0x2c] sm:$0xf]
  %v705 = vld [vmem:[%s692 + $0x30] sm:$0xf]
  %v706 = vld [vmem:[%s692 + $0x34] sm:$0xf]
  %v707 = vld [vmem:[%s692 + $0x38] sm:$0xf]
  %v708 = vld [vmem:[%s692 + $0x3c] sm:$0xf]
  %v725 = vunpack.c.l.b16 %v693
  %v726 = vunpack.c.l.b16 %v694
  %v727 = vunpack.c.l.b16 %v695
  %v728 = vunpack.c.l.b16 %v696
  %v729 = vunpack.c.l.b16 %v697
  %v730 = vunpack.c.l.b16 %v698
  %v731 = vunpack.c.l.b16 %v699
  %v732 = vunpack.c.l.b16 %v700
  %v733 = vunpack.c.l.b16 %v701
  %v734 = vunpack.c.l.b16 %v702
  %v735 = vunpack.c.l.b16 %v703
  %v736 = vunpack.c.l.b16 %v704
  %v737 = vunpack.c.l.b16 %v705
  %v738 = vunpack.c.l.b16 %v706
  %v739 = vunpack.c.l.b16 %v707
  %v740 = vunpack.c.l.b16 %v708
  %v741 = vpack.c.b16 %v726, %v725
  %v742 = vpack.c.b16 %v728, %v727
  %v743 = vpack.c.b16 %v730, %v729
  %v744 = vpack.c.b16 %v732, %v731
  %v745 = vpack.c.b16 %v734, %v733
  %v746 = vpack.c.b16 %v736, %v735
  %v747 = vpack.c.b16 %v738, %v737
  %v748 = vpack.c.b16 %v740, %v739
  %757 = vmatprep.subr.bf16.mxu0 0
  %758 = vmatpush1.bf16.msra.mxu0 %v748
  %759 = vmatprep.subr.bf16.mxu0 0
  %760 = vmatpush1.bf16.msra.mxu0 %v747
  %761 = vmatprep.subr.bf16.mxu0 0
  %762 = vmatpush1.bf16.msra.mxu0 %v746
  %763 = vmatprep.subr.bf16.mxu0 0
  %764 = vmatpush1.bf16.msra.mxu0 %v745
  %765 = vmatprep.subr.bf16.mxu0 0
  %766 = vmatpush1.bf16.msra.mxu0 %v744
  %767 = vmatprep.subr.bf16.mxu0 0
  %768 = vmatpush1.bf16.msra.mxu0 %v743
  %769 = vmatprep.subr.bf16.mxu0 0
  %770 = vmatpush1.bf16.msra.mxu0 %v742
  %771 = vmatprep.subr.bf16.mxu0 0
  %772 = vmatpush1.bf16.msra.mxu0 %v741
  %773 = vmatprep.subr.bf16.mxu0 0
  %774 = vmatpush2.bf16.msra.mxu0 0
  %775 = vmatprep.subr.bf16.mxu0 0
  %776 = vmatpush2.bf16.msra.mxu0 0
  %777 = vmatprep.subr.bf16.mxu0 0
  %778 = vmatpush2.bf16.msra.mxu0 0
  %779 = vmatprep.subr.bf16.mxu0 0
  %780 = vmatpush2.bf16.msra.mxu0 0
  %781 = vmatprep.subr.bf16.mxu0 0
  %782 = vmatpush2.bf16.msra.mxu0 0
  %783 = vmatprep.subr.bf16.mxu0 0
  %784 = vmatpush2.bf16.msra.mxu0 0
  %785 = vmatprep.subr.bf16.mxu0 0
  %786 = vmatpush2.bf16.msra.mxu0 0
  %787 = vmatprep.subr.bf16.mxu0 0
  %788 = vmatpush2.bf16.msra.mxu0 0
  %789 = vmatprep.mubr.bf16.mxu0 0
  %790 = vmatmul.mubr.bf16.gmra.mxu0 %v684
  %v791 = vpop.f32.mrf.mxu0
  %v792 = vadd.f32 0.0, %v791
  %v793 = vpop.f32.mrf.mxu0
  %v794 = vpop.f32.mrf.mxu0
  %v795 = vadd.f32 0.0, %v794
  %v796 = vpop.f32.mrf.mxu0
  %797 = vmatprep.mubr.bf16.mxu0 0
  %798 = vmatmul.mubr.bf16.gmra.mxu0 %v685
  %v799 = vpop.f32.mrf.mxu0
  %v800 = vadd.f32 0.0, %v799
  %v801 = vpop.f32.mrf.mxu0
  %v802 = vpop.f32.mrf.mxu0
  %v803 = vadd.f32 0.0, %v802
  %v804 = vpop.f32.mrf.mxu0
  %805 = vmatprep.mubr.bf16.mxu0 0
  %806 = vmatmul.mubr.bf16.gmra.mxu0 %v686
  %v807 = vpop.f32.mrf.mxu0
  %v808 = vadd.f32 0.0, %v807
  %v809 = vpop.f32.mrf.mxu0
  %v810 = vpop.f32.mrf.mxu0
  %v811 = vadd.f32 0.0, %v810
  %v812 = vpop.f32.mrf.mxu0
  %813 = vmatprep.mubr.bf16.mxu0 0
  %814 = vmatmul.mubr.bf16.gmra.mxu0 %v687
  %v815 = vpop.f32.mrf.mxu0
  %v816 = vadd.f32 0.0, %v815
  %v817 = vpop.f32.mrf.mxu0
  %v818 = vpop.f32.mrf.mxu0
  %v819 = vadd.f32 0.0, %v818
  %v820 = vpop.f32.mrf.mxu0
  %821 = vmatprep.mubr.bf16.mxu0 0
  %822 = vmatmul.mubr.bf16.gmra.mxu0 %v688
  %v823 = vpop.f32.mrf.mxu0
  %v824 = vadd.f32 0.0, %v823
  %v825 = vpop.f32.mrf.mxu0
  %v826 = vpop.f32.mrf.mxu0
  %v827 = vadd.f32 0.0, %v826
  %v828 = vpop.f32.mrf.mxu0
  %829 = vmatprep.mubr.bf16.mxu0 0
  %830 = vmatmul.mubr.bf16.gmra.mxu0 %v689
  %v831 = vpop.f32.mrf.mxu0
  %v832 = vadd.f32 0.0, %v831
  %v833 = vpop.f32.mrf.mxu0
  %v834 = vpop.f32.mrf.mxu0
  %v835 = vadd.f32 0.0, %v834
  %v836 = vpop.f32.mrf.mxu0
  %837 = vmatprep.mubr.bf16.mxu0 0
  %838 = vmatmul.mubr.bf16.gmra.mxu0 %v690
  %v839 = vpop.f32.mrf.mxu0
  %v840 = vadd.f32 0.0, %v839
  %v841 = vpop.f32.mrf.mxu0
  %v842 = vpop.f32.mrf.mxu0
  %v843 = vadd.f32 0.0, %v842
  %v844 = vpop.f32.mrf.mxu0
  %845 = vmatprep.mubr.bf16.mxu0 0
  %846 = vmatmul.mubr.bf16.gmra.mxu0 %v691
  %v847 = vpop.f32.mrf.mxu0
  %v848 = vadd.f32 0.0, %v847
  %v849 = vpop.f32.mrf.mxu0
  %v850 = vpop.f32.mrf.mxu0
  %v851 = vadd.f32 0.0, %v850
  %v852 = vpop.f32.mrf.mxu0
  %853 = vdwg.mxu0
  %v870 = vunpack.c.l.b16 %v652
  %v871 = vunpack.c.l.b16 %v653
  %v872 = vunpack.c.l.b16 %v654
  %v873 = vunpack.c.l.b16 %v655
  %v874 = vunpack.c.l.b16 %v656
  %v875 = vunpack.c.l.b16 %v657
  %v876 = vunpack.c.l.b16 %v658
  %v877 = vunpack.c.l.b16 %v659
  %v878 = vunpack.c.l.b16 %v660
  %v879 = vunpack.c.l.b16 %v661
  %v880 = vunpack.c.l.b16 %v662
  %v881 = vunpack.c.l.b16 %v663
  %v882 = vunpack.c.l.b16 %v664
  %v883 = vunpack.c.l.b16 %v665
  %v884 = vunpack.c.l.b16 %v666
  %v885 = vunpack.c.l.b16 %v667
  %v886 = vpack.c.b16 %v871, %v870
  %v887 = vpack.c.b16 %v873, %v872
  %v888 = vpack.c.b16 %v875, %v874
  %v889 = vpack.c.b16 %v877, %v876
  %v890 = vpack.c.b16 %v879, %v878
  %v891 = vpack.c.b16 %v881, %v880
  %v892 = vpack.c.b16 %v883, %v882
  %v893 = vpack.c.b16 %v885, %v884
  %902 = vmatprep.subr.bf16.mxu0 0
  %903 = vmatpush1.bf16.msra.mxu0 %v893
  %904 = vmatprep.subr.bf16.mxu0 0
  %905 = vmatpush1.bf16.msra.mxu0 %v892
  %906 = vmatprep.subr.bf16.mxu0 0
  %907 = vmatpush1.bf16.msra.mxu0 %v891
  %908 = vmatprep.subr.bf16.mxu0 0
  %909 = vmatpush1.bf16.msra.mxu0 %v890
  %910 = vmatprep.subr.bf16.mxu0 0
  %911 = vmatpush1.bf16.msra.mxu0 %v889
  %912 = vmatprep.subr.bf16.mxu0 0
  %913 = vmatpush1.bf16.msra.mxu0 %v888
  %914 = vmatprep.subr.bf16.mxu0 0
  %915 = vmatpush1.bf16.msra.mxu0 %v887
  %916 = vmatprep.subr.bf16.mxu0 0
  %917 = vmatpush1.bf16.msra.mxu0 %v886
  %918 = vmatprep.subr.bf16.mxu0 0
  %919 = vmatpush2.bf16.msra.mxu0 0
  %920 = vmatprep.subr.bf16.mxu0 0
  %921 = vmatpush2.bf16.msra.mxu0 0
  %922 = vmatprep.subr.bf16.mxu0 0
  %923 = vmatpush2.bf16.msra.mxu0 0
  %924 = vmatprep.subr.bf16.mxu0 0
  %925 = vmatpush2.bf16.msra.mxu0 0
  %926 = vmatprep.subr.bf16.mxu0 0
  %927 = vmatpush2.bf16.msra.mxu0 0
  %928 = vmatprep.subr.bf16.mxu0 0
  %929 = vmatpush2.bf16.msra.mxu0 0
  %930 = vmatprep.subr.bf16.mxu0 0
  %931 = vmatpush2.bf16.msra.mxu0 0
  %932 = vmatprep.subr.bf16.mxu0 0
  %933 = vmatpush2.bf16.msra.mxu0 0
  %934 = vmatprep.mubr.bf16.mxu0 0
  %935 = vmatmul.mubr.bf16.gmra.mxu0 %v644
  %v936 = vpop.f32.mrf.mxu0
  %v937 = vadd.f32 %v792, %v936
  %v938 = vpop.f32.mrf.mxu0
  %v939 = vpop.f32.mrf.mxu0
  %v940 = vadd.f32 %v795, %v939
  %v941 = vpop.f32.mrf.mxu0
  %942 = vmatprep.mubr.bf16.mxu0 0
  %943 = vmatmul.mubr.bf16.gmra.mxu0 %v645
  %v944 = vpop.f32.mrf.mxu0
  %v945 = vadd.f32 %v800, %v944
  %v946 = vpop.f32.mrf.mxu0
  %v947 = vpop.f32.mrf.mxu0
  %v948 = vadd.f32 %v803, %v947
  %v949 = vpop.f32.mrf.mxu0
  %950 = vmatprep.mubr.bf16.mxu0 0
  %951 = vmatmul.mubr.bf16.gmra.mxu0 %v646
  %v952 = vpop.f32.mrf.mxu0
  %v953 = vadd.f32 %v808, %v952
  %v954 = vpop.f32.mrf.mxu0
  %v955 = vpop.f32.mrf.mxu0
  %v956 = vadd.f32 %v811, %v955
  %v957 = vpop.f32.mrf.mxu0
  %958 = vmatprep.mubr.bf16.mxu0 0
  %959 = vmatmul.mubr.bf16.gmra.mxu0 %v647
  %v960 = vpop.f32.mrf.mxu0
  %v961 = vadd.f32 %v816, %v960
  %v962 = vpop.f32.mrf.mxu0
  %v963 = vpop.f32.mrf.mxu0
  %v964 = vadd.f32 %v819, %v963
  %v965 = vpop.f32.mrf.mxu0
  %966 = vmatprep.mubr.bf16.mxu0 0
  %967 = vmatmul.mubr.bf16.gmra.mxu0 %v648
  %v968 = vpop.f32.mrf.mxu0
  %v969 = vadd.f32 %v824, %v968
  %v970 = vpop.f32.mrf.mxu0
  %v971 = vpop.f32.mrf.mxu0
  %v972 = vadd.f32 %v827, %v971
  %v973 = vpop.f32.mrf.mxu0
  %974 = vmatprep.mubr.bf16.mxu0 0
  %975 = vmatmul.mubr.bf16.gmra.mxu0 %v649
  %v976 = vpop.f32.mrf.mxu0
  %v977 = vadd.f32 %v832, %v976
  %v978 = vpop.f32.mrf.mxu0
  %v979 = vpop.f32.mrf.mxu0
  %v980 = vadd.f32 %v835, %v979
  %v981 = vpop.f32.mrf.mxu0
  %982 = vmatprep.mubr.bf16.mxu0 0
  %983 = vmatmul.mubr.bf16.gmra.mxu0 %v650
  %v984 = vpop.f32.mrf.mxu0
  %v985 = vadd.f32 %v840, %v984
  %v986 = vpop.f32.mrf.mxu0
  %v987 = vpop.f32.mrf.mxu0
  %v988 = vadd.f32 %v843, %v987
  %v989 = vpop.f32.mrf.mxu0
  %990 = vmatprep.mubr.bf16.mxu0 0
  %991 = vmatmul.mubr.bf16.gmra.mxu0 %v651
  %v992 = vpop.f32.mrf.mxu0
  %v993 = vadd.f32 %v848, %v992
  %v994 = vpop.f32.mrf.mxu0
  %v995 = vpop.f32.mrf.mxu0
  %v996 = vadd.f32 %v851, %v995
  %v997 = vpop.f32.mrf.mxu0
  %998 = vdwg.mxu0
  %v999 = vld [vmem:[#allocation2 + $0x2] sm:$0xff]
  %v1000 = vld [vmem:[#allocation2 + $0xa] sm:$0xff]
  %v1001 = vld [vmem:[#allocation2 + $0x1a] sm:$0xff]
  %v1002 = vld [vmem:[#allocation2 + $0x22] sm:$0xff]
  %v1003 = vld [vmem:[#allocation2 + $0x32] sm:$0xff]
  %v1004 = vld [vmem:[#allocation2 + $0x3a] sm:$0xff]
  %v1005 = vld [vmem:[#allocation2 + $0x4a] sm:$0xff]
  %v1006 = vld [vmem:[#allocation2 + $0x52] sm:$0xff]
  %v1007 = vld [vmem:[#allocation2 + $0x62] sm:$0xff]
  %v1008 = vld [vmem:[#allocation2 + $0x6a] sm:$0xff]
  %v1009 = vld [vmem:[#allocation2 + $0x7a] sm:$0xff]
  %v1010 = vld [vmem:[#allocation2 + $0x82] sm:$0xff]
  %v1011 = vld [vmem:[#allocation2 + $0x92] sm:$0xff]
  %v1012 = vld [vmem:[#allocation2 + $0x9a] sm:$0xff]
  %v1013 = vld [vmem:[#allocation2 + $0xaa] sm:$0xff]
  %v1014 = vld [vmem:[#allocation2 + $0xb2] sm:$0xff]
  %v1015 = vpack.c.bf16 %v1000, %v999
  %v1016 = vpack.c.bf16 %v1002, %v1001
  %v1017 = vpack.c.bf16 %v1004, %v1003
  %v1018 = vpack.c.bf16 %v1006, %v1005
  %v1019 = vpack.c.bf16 %v1008, %v1007
  %v1020 = vpack.c.bf16 %v1010, %v1009
  %v1021 = vpack.c.bf16 %v1012, %v1011
  %v1022 = vpack.c.bf16 %v1014, %v1013
  %s1023 = scalar_lea.vmem %s3, 128
  %v1024 = vld [vmem:[%s1023] sm:$0xf]
  %v1025 = vld [vmem:[%s1023 + $0x4] sm:$0xf]
  %v1026 = vld [vmem:[%s1023 + $0x8] sm:$0xf]
  %v1027 = vld [vmem:[%s1023 + $0xc] sm:$0xf]
  %v1028 = vld [vmem:[%s1023 + $0x10] sm:$0xf]
  %v1029 = vld [vmem:[%s1023 + $0x14] sm:$0xf]
  %v1030 = vld [vmem:[%s1023 + $0x18] sm:$0xf]
  %v1031 = vld [vmem:[%s1023 + $0x1c] sm:$0xf]
  %v1032 = vld [vmem:[%s1023 + $0x20] sm:$0xf]
  %v1033 = vld [vmem:[%s1023 + $0x24] sm:$0xf]
  %v1034 = vld [vmem:[%s1023 + $0x28] sm:$0xf]
  %v1035 = vld [vmem:[%s1023 + $0x2c] sm:$0xf]
  %v1036 = vld [vmem:[%s1023 + $0x30] sm:$0xf]
  %v1037 = vld [vmem:[%s1023 + $0x34] sm:$0xf]
  %v1038 = vld [vmem:[%s1023 + $0x38] sm:$0xf]
  %v1039 = vld [vmem:[%s1023 + $0x3c] sm:$0xf]
  %v1056 = vunpack.c.l.b16 %v1024
  %v1057 = vunpack.c.l.b16 %v1025
  %v1058 = vunpack.c.l.b16 %v1026
  %v1059 = vunpack.c.l.b16 %v1027
  %v1060 = vunpack.c.l.b16 %v1028
  %v1061 = vunpack.c.l.b16 %v1029
  %v1062 = vunpack.c.l.b16 %v1030
  %v1063 = vunpack.c.l.b16 %v1031
  %v1064 = vunpack.c.l.b16 %v1032
  %v1065 = vunpack.c.l.b16 %v1033
  %v1066 = vunpack.c.l.b16 %v1034
  %v1067 = vunpack.c.l.b16 %v1035
  %v1068 = vunpack.c.l.b16 %v1036
  %v1069 = vunpack.c.l.b16 %v1037
  %v1070 = vunpack.c.l.b16 %v1038
  %v1071 = vunpack.c.l.b16 %v1039
  %v1072 = vpack.c.b16 %v1057, %v1056
  %v1073 = vpack.c.b16 %v1059, %v1058
  %v1074 = vpack.c.b16 %v1061, %v1060
  %v1075 = vpack.c.b16 %v1063, %v1062
  %v1076 = vpack.c.b16 %v1065, %v1064
  %v1077 = vpack.c.b16 %v1067, %v1066
  %v1078 = vpack.c.b16 %v1069, %v1068
  %v1079 = vpack.c.b16 %v1071, %v1070
  %1088 = vmatprep.subr.bf16.mxu0 0
  %1089 = vmatpush1.bf16.msra.mxu0 %v1079
  %1090 = vmatprep.subr.bf16.mxu0 0
  %1091 = vmatpush1.bf16.msra.mxu0 %v1078
  %1092 = vmatprep.subr.bf16.mxu0 0
  %1093 = vmatpush1.bf16.msra.mxu0 %v1077
  %1094 = vmatprep.subr.bf16.mxu0 0
  %1095 = vmatpush1.bf16.msra.mxu0 %v1076
  %1096 = vmatprep.subr.bf16.mxu0 0
  %1097 = vmatpush1.bf16.msra.mxu0 %v1075
  %1098 = vmatprep.subr.bf16.mxu0 0
  %1099 = vmatpush1.bf16.msra.mxu0 %v1074
  %1100 = vmatprep.subr.bf16.mxu0 0
  %1101 = vmatpush1.bf16.msra.mxu0 %v1073
  %1102 = vmatprep.subr.bf16.mxu0 0
  %1103 = vmatpush1.bf16.msra.mxu0 %v1072
  %1104 = vmatprep.subr.bf16.mxu0 0
  %1105 = vmatpush2.bf16.msra.mxu0 0
  %1106 = vmatprep.subr.bf16.mxu0 0
  %1107 = vmatpush2.bf16.msra.mxu0 0
  %1108 = vmatprep.subr.bf16.mxu0 0
  %1109 = vmatpush2.bf16.msra.mxu0 0
  %1110 = vmatprep.subr.bf16.mxu0 0
  %1111 = vmatpush2.bf16.msra.mxu0 0
  %1112 = vmatprep.subr.bf16.mxu0 0
  %1113 = vmatpush2.bf16.msra.mxu0 0
  %1114 = vmatprep.subr.bf16.mxu0 0
  %1115 = vmatpush2.bf16.msra.mxu0 0
  %1116 = vmatprep.subr.bf16.mxu0 0
  %1117 = vmatpush2.bf16.msra.mxu0 0
  %1118 = vmatprep.subr.bf16.mxu0 0
  %1119 = vmatpush2.bf16.msra.mxu0 0
  %1120 = vmatprep.mubr.bf16.mxu0 0
  %1121 = vmatmul.mubr.bf16.gmra.mxu0 %v1015
  %v1122 = vpop.f32.mrf.mxu0
  %v1123 = vadd.f32 0.0, %v1122
  %v1124 = vpop.f32.mrf.mxu0
  %v1125 = vpop.f32.mrf.mxu0
  %v1126 = vadd.f32 0.0, %v1125
  %v1127 = vpop.f32.mrf.mxu0
  %1128 = vmatprep.mubr.bf16.mxu0 0
  %1129 = vmatmul.mubr.bf16.gmra.mxu0 %v1016
  %v1130 = vpop.f32.mrf.mxu0
  %v1131 = vadd.f32 0.0, %v1130
  %v1132 = vpop.f32.mrf.mxu0
  %v1133 = vpop.f32.mrf.mxu0
  %v1134 = vadd.f32 0.0, %v1133
  %v1135 = vpop.f32.mrf.mxu0
  %1136 = vmatprep.mubr.bf16.mxu0 0
  %1137 = vmatmul.mubr.bf16.gmra.mxu0 %v1017
  %v1138 = vpop.f32.mrf.mxu0
  %v1139 = vadd.f32 0.0, %v1138
  %v1140 = vpop.f32.mrf.mxu0
  %v1141 = vpop.f32.mrf.mxu0
  %v1142 = vadd.f32 0.0, %v1141
  %v1143 = vpop.f32.mrf.mxu0
  %1144 = vmatprep.mubr.bf16.mxu0 0
  %1145 = vmatmul.mubr.bf16.gmra.mxu0 %v1018
  %v1146 = vpop.f32.mrf.mxu0
  %v1147 = vadd.f32 0.0, %v1146
  %v1148 = vpop.f32.mrf.mxu0
  %v1149 = vpop.f32.mrf.mxu0
  %v1150 = vadd.f32 0.0, %v1149
  %v1151 = vpop.f32.mrf.mxu0
  %1152 = vmatprep.mubr.bf16.mxu0 0
  %1153 = vmatmul.mubr.bf16.gmra.mxu0 %v1019
  %v1154 = vpop.f32.mrf.mxu0
  %v1155 = vadd.f32 0.0, %v1154
  %v1156 = vpop.f32.mrf.mxu0
  %v1157 = vpop.f32.mrf.mxu0
  %v1158 = vadd.f32 0.0, %v1157
  %v1159 = vpop.f32.mrf.mxu0
  %1160 = vmatprep.mubr.bf16.mxu0 0
  %1161 = vmatmul.mubr.bf16.gmra.mxu0 %v1020
  %v1162 = vpop.f32.mrf.mxu0
  %v1163 = vadd.f32 0.0, %v1162
  %v1164 = vpop.f32.mrf.mxu0
  %v1165 = vpop.f32.mrf.mxu0
  %v1166 = vadd.f32 0.0, %v1165
  %v1167 = vpop.f32.mrf.mxu0
  %1168 = vmatprep.mubr.bf16.mxu0 0
  %1169 = vmatmul.mubr.bf16.gmra.mxu0 %v1021
  %v1170 = vpop.f32.mrf.mxu0
  %v1171 = vadd.f32 0.0, %v1170
  %v1172 = vpop.f32.mrf.mxu0
  %v1173 = vpop.f32.mrf.mxu0
  %v1174 = vadd.f32 0.0, %v1173
  %v1175 = vpop.f32.mrf.mxu0
  %1176 = vmatprep.mubr.bf16.mxu0 0
  %1177 = vmatmul.mubr.bf16.gmra.mxu0 %v1022
  %v1178 = vpop.f32.mrf.mxu0
  %v1179 = vadd.f32 0.0, %v1178
  %v1180 = vpop.f32.mrf.mxu0
  %v1181 = vpop.f32.mrf.mxu0
  %v1182 = vadd.f32 0.0, %v1181
  %v1183 = vpop.f32.mrf.mxu0
  %1184 = vdwg.mxu0
  %v1185 = vadd.f32 %v937, %v1123
  %v1186 = vadd.f32 %v940, %v1126
  %v1187 = vadd.f32 %v945, %v1131
  %v1188 = vadd.f32 %v948, %v1134
  %v1189 = vadd.f32 %v953, %v1139
  %v1190 = vadd.f32 %v956, %v1142
  %v1191 = vadd.f32 %v961, %v1147
  %v1192 = vadd.f32 %v964, %v1150
  %v1193 = vadd.f32 %v969, %v1155
  %v1194 = vadd.f32 %v972, %v1158
  %v1195 = vadd.f32 %v977, %v1163
  %v1196 = vadd.f32 %v980, %v1166
  %v1197 = vadd.f32 %v985, %v1171
  %v1198 = vadd.f32 %v988, %v1174
  %v1199 = vadd.f32 %v993, %v1179
  %v1200 = vadd.f32 %v996, %v1182
  %v1201 = vld [vmem:[%s4] sm:$0x1]
  %v1203 = vlaneseq
  %v1204 = vshrl.u32 %v1203, 7
  %v1205 = vsub.s32 0, %v1204
  %v1206 = vrot.slane %v1201, %v1205
  %v1208 = vadd.f32 %v1185, %v1206
  %v1209 = vadd.f32 %v1186, %v1206
  %v1210 = vadd.f32 %v1187, %v1206
  %v1211 = vadd.f32 %v1188, %v1206
  %v1212 = vadd.f32 %v1189, %v1206
  %v1213 = vadd.f32 %v1190, %v1206
  %v1214 = vadd.f32 %v1191, %v1206
  %v1215 = vadd.f32 %v1192, %v1206
  %v1216 = vadd.f32 %v1193, %v1206
  %v1217 = vadd.f32 %v1194, %v1206
  %v1218 = vadd.f32 %v1195, %v1206
  %v1219 = vadd.f32 %v1196, %v1206
  %v1220 = vadd.f32 %v1197, %v1206
  %v1221 = vadd.f32 %v1198, %v1206
  %v1222 = vadd.f32 %v1199, %v1206
  %v1223 = vadd.f32 %v1200, %v1206
  %v1224 = vmax.f32 %v1208, 0.0
  %v1225 = vmax.f32 %v1209, 0.0
  %v1226 = vmax.f32 %v1210, 0.0
  %v1227 = vmax.f32 %v1211, 0.0
  %v1228 = vmax.f32 %v1212, 0.0
  %v1229 = vmax.f32 %v1213, 0.0
  %v1230 = vmax.f32 %v1214, 0.0
  %v1231 = vmax.f32 %v1215, 0.0
  %v1232 = vmax.f32 %v1216, 0.0
  %v1233 = vmax.f32 %v1217, 0.0
  %v1234 = vmax.f32 %v1218, 0.0
  %v1235 = vmax.f32 %v1219, 0.0
  %v1236 = vmax.f32 %v1220, 0.0
  %v1237 = vmax.f32 %v1221, 0.0
  %v1238 = vmax.f32 %v1222, 0.0
  %v1239 = vmax.f32 %v1223, 0.0
  %v1240 = vpack.c.bf16 %v1225, %v1224
  %v1241 = vpack.c.bf16 %v1227, %v1226
  %v1242 = vpack.c.bf16 %v1229, %v1228
  %v1243 = vpack.c.bf16 %v1231, %v1230
  %v1244 = vpack.c.bf16 %v1233, %v1232
  %v1245 = vpack.c.bf16 %v1235, %v1234
  %v1246 = vpack.c.bf16 %v1237, %v1236
  %v1247 = vpack.c.bf16 %v1239, %v1238
  %v1248 = vld [vmem:[%s5] sm:$0xff]
  %v1249 = vld [vmem:[%s5 + $0x8] sm:$0xff]
  %v1250 = vld [vmem:[%s5 + $0x10] sm:$0xff]
  %v1251 = vld [vmem:[%s5 + $0x18] sm:$0xff]
  %v1252 = vld [vmem:[%s5 + $0x20] sm:$0xff]
  %v1253 = vld [vmem:[%s5 + $0x28] sm:$0xff]
  %v1254 = vld [vmem:[%s5 + $0x30] sm:$0xff]
  %v1255 = vld [vmem:[%s5 + $0x38] sm:$0xff]
  %v1256 = vld [vmem:[%s5 + $0x40] sm:$0xff]
  %v1257 = vld [vmem:[%s5 + $0x48] sm:$0xff]
  %v1258 = vld [vmem:[%s5 + $0x50] sm:$0xff]
  %v1259 = vld [vmem:[%s5 + $0x58] sm:$0xff]
  %v1260 = vld [vmem:[%s5 + $0x60] sm:$0xff]
  %v1261 = vld [vmem:[%s5 + $0x68] sm:$0xff]
  %v1262 = vld [vmem:[%s5 + $0x70] sm:$0xff]
  %v1263 = vld [vmem:[%s5 + $0x78] sm:$0xff]
  %v1264 = vld [vmem:[%s5 + $0x80] sm:$0xff]
  %v1265 = vld [vmem:[%s5 + $0x88] sm:$0xff]
  %v1266 = vld [vmem:[%s5 + $0x90] sm:$0xff]
  %v1267 = vld [vmem:[%s5 + $0x98] sm:$0xff]
  %v1268 = vld [vmem:[%s5 + $0xa0] sm:$0xff]
  %v1269 = vld [vmem:[%s5 + $0xa8] sm:$0xff]
  %v1270 = vld [vmem:[%s5 + $0xb0] sm:$0xff]
  %v1271 = vld [vmem:[%s5 + $0xb8] sm:$0xff]
  %v1272 = vld [vmem:[%s5 + $0xc0] sm:$0xff]
  %v1273 = vld [vmem:[%s5 + $0xc8] sm:$0xff]
  %v1274 = vld [vmem:[%s5 + $0xd0] sm:$0xff]
  %v1275 = vld [vmem:[%s5 + $0xd8] sm:$0xff]
  %v1276 = vld [vmem:[%s5 + $0xe0] sm:$0xff]
  %v1277 = vld [vmem:[%s5 + $0xe8] sm:$0xff]
  %v1278 = vld [vmem:[%s5 + $0xf0] sm:$0xff]
  %v1279 = vld [vmem:[%s5 + $0xf8] sm:$0xff]
  %v1280 = vld [vmem:[%s6] sm:$0xf]
  %v1282 = vlaneseq
  %v1283 = vshrl.u32 %v1282, 7
  %v1284 = vsub.s32 0, %v1283
  %v1285 = vrot.slane %v1280, %v1284
  %v1286 = vlaneseq
  %v1287 = vshrl.u32 %v1286, 7
  %v1288 = vsub.s32 1, %v1287
  %v1289 = vrot.slane %v1280, %v1288
  %v1290 = vlaneseq
  %v1291 = vshrl.u32 %v1290, 7
  %v1292 = vsub.s32 2, %v1291
  %v1293 = vrot.slane %v1280, %v1292
  %v1294 = vlaneseq
  %v1295 = vshrl.u32 %v1294, 7
  %v1296 = vsub.s32 3, %v1295
  %v1297 = vrot.slane %v1280, %v1296
  %v1334 = vunpack.c.l.b16 %v1248
  %v1335 = vunpack.c.h.b16 %v1248
  %v1336 = vunpack.c.l.b16 %v1249
  %v1337 = vunpack.c.h.b16 %v1249
  %v1338 = vunpack.c.l.b16 %v1250
  %v1339 = vunpack.c.h.b16 %v1250
  %v1340 = vunpack.c.l.b16 %v1251
  %v1341 = vunpack.c.h.b16 %v1251
  %v1342 = vunpack.c.l.b16 %v1252
  %v1343 = vunpack.c.h.b16 %v1252
  %v1344 = vunpack.c.l.b16 %v1253
  %v1345 = vunpack.c.h.b16 %v1253
  %v1346 = vunpack.c.l.b16 %v1254
  %v1347 = vunpack.c.h.b16 %v1254
  %v1348 = vunpack.c.l.b16 %v1255
  %v1349 = vunpack.c.h.b16 %v1255
  %v1350 = vunpack.c.l.b16 %v1256
  %v1351 = vunpack.c.h.b16 %v1256
  %v1352 = vunpack.c.l.b16 %v1257
  %v1353 = vunpack.c.h.b16 %v1257
  %v1354 = vunpack.c.l.b16 %v1258
  %v1355 = vunpack.c.h.b16 %v1258
  %v1356 = vunpack.c.l.b16 %v1259
  %v1357 = vunpack.c.h.b16 %v1259
  %v1358 = vunpack.c.l.b16 %v1260
  %v1359 = vunpack.c.h.b16 %v1260
  %v1360 = vunpack.c.l.b16 %v1261
  %v1361 = vunpack.c.h.b16 %v1261
  %v1362 = vunpack.c.l.b16 %v1262
  %v1363 = vunpack.c.h.b16 %v1262
  %v1364 = vunpack.c.l.b16 %v1263
  %v1365 = vunpack.c.h.b16 %v1263
  %v1366 = vunpack.c.l.b16 %v1264
  %v1367 = vunpack.c.h.b16 %v1264
  %v1368 = vunpack.c.l.b16 %v1265
  %v1369 = vunpack.c.h.b16 %v1265
  %v1370 = vunpack.c.l.b16 %v1266
  %v1371 = vunpack.c.h.b16 %v1266
  %v1372 = vunpack.c.l.b16 %v1267
  %v1373 = vunpack.c.h.b16 %v1267
  %v1374 = vunpack.c.l.b16 %v1268
  %v1375 = vunpack.c.h.b16 %v1268
  %v1376 = vunpack.c.l.b16 %v1269
  %v1377 = vunpack.c.h.b16 %v1269
  %v1378 = vunpack.c.l.b16 %v1270
  %v1379 = vunpack.c.h.b16 %v1270
  %v1380 = vunpack.c.l.b16 %v1271
  %v1381 = vunpack.c.h.b16 %v1271
  %v1382 = vunpack.c.l.b16 %v1272
  %v1383 = vunpack.c.h.b16 %v1272
  %v1384 = vunpack.c.l.b16 %v1273
  %v1385 = vunpack.c.h.b16 %v1273
  %v1386 = vunpack.c.l.b16 %v1274
  %v1387 = vunpack.c.h.b16 %v1274
  %v1388 = vunpack.c.l.b16 %v1275
  %v1389 = vunpack.c.h.b16 %v1275
  %v1390 = vunpack.c.l.b16 %v1276
  %v1391 = vunpack.c.h.b16 %v1276
  %v1392 = vunpack.c.l.b16 %v1277
  %v1393 = vunpack.c.h.b16 %v1277
  %v1394 = vunpack.c.l.b16 %v1278
  %v1395 = vunpack.c.h.b16 %v1278
  %v1396 = vunpack.c.l.b16 %v1279
  %v1397 = vunpack.c.h.b16 %v1279
  %v1398 = vpack.c.b16 %v1338, %v1334
  %v1399 = vpack.c.b16 %v1339, %v1335
  %v1400 = vpack.c.b16 %v1340, %v1336
  %v1401 = vpack.c.b16 %v1341, %v1337
  %v1402 = vpack.c.b16 %v1346, %v1342
  %v1403 = vpack.c.b16 %v1347, %v1343
  %v1404 = vpack.c.b16 %v1348, %v1344
  %v1405 = vpack.c.b16 %v1349, %v1345
  %v1406 = vpack.c.b16 %v1354, %v1350
  %v1407 = vpack.c.b16 %v1355, %v1351
  %v1408 = vpack.c.b16 %v1356, %v1352
  %v1409 = vpack.c.b16 %v1357, %v1353
  %v1410 = vpack.c.b16 %v1362, %v1358
  %v1411 = vpack.c.b16 %v1363, %v1359
  %v1412 = vpack.c.b16 %v1364, %v1360
  %v1413 = vpack.c.b16 %v1365, %v1361
  %v1414 = vpack.c.b16 %v1370, %v1366
  %v1415 = vpack.c.b16 %v1371, %v1367
  %v1416 = vpack.c.b16 %v1372, %v1368
  %v1417 = vpack.c.b16 %v1373, %v1369
  %v1418 = vpack.c.b16 %v1378, %v1374
  %v1419 = vpack.c.b16 %v1379, %v1375
  %v1420 = vpack.c.b16 %v1380, %v1376
  %v1421 = vpack.c.b16 %v1381, %v1377
  %v1422 = vpack.c.b16 %v1386, %v1382
  %v1423 = vpack.c.b16 %v1387, %v1383
  %v1424 = vpack.c.b16 %v1388, %v1384
  %v1425 = vpack.c.b16 %v1389, %v1385
  %v1426 = vpack.c.b16 %v1394, %v1390
  %v1427 = vpack.c.b16 %v1395, %v1391
  %v1428 = vpack.c.b16 %v1396, %v1392
  %v1429 = vpack.c.b16 %v1397, %v1393
  %1462 = vmatprep.subr.bf16.mxu0 %v1427
  %1463 = vmatpush1.bf16.msra.mxu0 %v1426
  %1464 = vmatprep.subr.bf16.mxu0 %v1423
  %1465 = vmatpush1.bf16.msra.mxu0 %v1422
  %1466 = vmatprep.subr.bf16.mxu0 %v1419
  %1467 = vmatpush1.bf16.msra.mxu0 %v1418
  %1468 = vmatprep.subr.bf16.mxu0 %v1415
  %1469 = vmatpush1.bf16.msra.mxu0 %v1414
  %1470 = vmatprep.subr.bf16.mxu0 %v1411
  %1471 = vmatpush1.bf16.msra.mxu0 %v1410
  %1472 = vmatprep.subr.bf16.mxu0 %v1407
  %1473 = vmatpush1.bf16.msra.mxu0 %v1406
  %1474 = vmatprep.subr.bf16.mxu0 %v1403
  %1475 = vmatpush1.bf16.msra.mxu0 %v1402
  %1476 = vmatprep.subr.bf16.mxu0 %v1399
  %1477 = vmatpush1.bf16.msra.mxu0 %v1398
  %1478 = vmatprep.subr.bf16.mxu0 0
  %1479 = vmatpush2.bf16.msra.mxu0 0
  %1480 = vmatprep.subr.bf16.mxu0 0
  %1481 = vmatpush2.bf16.msra.mxu0 0
  %1482 = vmatprep.subr.bf16.mxu0 0
  %1483 = vmatpush2.bf16.msra.mxu0 0
  %1484 = vmatprep.subr.bf16.mxu0 0
  %1485 = vmatpush2.bf16.msra.mxu0 0
  %1486 = vmatprep.subr.bf16.mxu0 0
  %1487 = vmatpush2.bf16.msra.mxu0 0
  %1488 = vmatprep.subr.bf16.mxu0 0
  %1489 = vmatpush2.bf16.msra.mxu0 0
  %1490 = vmatprep.subr.bf16.mxu0 0
  %1491 = vmatpush2.bf16.msra.mxu0 0
  %1492 = vmatprep.subr.bf16.mxu0 0
  %1493 = vmatpush2.bf16.msra.mxu0 0
  %1494 = vmatprep.mubr.bf16.mxu0 0
  %1495 = vmatmul.mubr.bf16.gmra.mxu0 %v1240
  %v1496 = vpop.f32.mrf.mxu0
  %v1497 = vadd.f32 %v1285, %v1496
  %v1498 = vpop.f32.mrf.mxu0
  %v1499 = vadd.f32 %v1289, %v1498
  %v1500 = vpop.f32.mrf.mxu0
  %v1501 = vadd.f32 %v1285, %v1500
  %v1502 = vpop.f32.mrf.mxu0
  %v1503 = vadd.f32 %v1289, %v1502
  %1504 = vmatprep.mubr.bf16.mxu0 0
  %1505 = vmatmul.mubr.bf16.gmra.mxu0 %v1241
  %v1506 = vpop.f32.mrf.mxu0
  %v1507 = vadd.f32 %v1285, %v1506
  %v1508 = vpop.f32.mrf.mxu0
  %v1509 = vadd.f32 %v1289, %v1508
  %v1510 = vpop.f32.mrf.mxu0
  %v1511 = vadd.f32 %v1285, %v1510
  %v1512 = vpop.f32.mrf.mxu0
  %v1513 = vadd.f32 %v1289, %v1512
  %1514 = vmatprep.mubr.bf16.mxu0 0
  %1515 = vmatmul.mubr.bf16.gmra.mxu0 %v1242
  %v1516 = vpop.f32.mrf.mxu0
  %v1517 = vadd.f32 %v1285, %v1516
  %v1518 = vpop.f32.mrf.mxu0
  %v1519 = vadd.f32 %v1289, %v1518
  %v1520 = vpop.f32.mrf.mxu0
  %v1521 = vadd.f32 %v1285, %v1520
  %v1522 = vpop.f32.mrf.mxu0
  %v1523 = vadd.f32 %v1289, %v1522
  %1524 = vmatprep.mubr.bf16.mxu0 0
  %1525 = vmatmul.mubr.bf16.gmra.mxu0 %v1243
  %v1526 = vpop.f32.mrf.mxu0
  %v1527 = vadd.f32 %v1285, %v1526
  %v1528 = vpop.f32.mrf.mxu0
  %v1529 = vadd.f32 %v1289, %v1528
  %v1530 = vpop.f32.mrf.mxu0
  %v1531 = vadd.f32 %v1285, %v1530
  %v1532 = vpop.f32.mrf.mxu0
  %v1533 = vadd.f32 %v1289, %v1532
  %1534 = vmatprep.mubr.bf16.mxu0 0
  %1535 = vmatmul.mubr.bf16.gmra.mxu0 %v1244
  %v1536 = vpop.f32.mrf.mxu0
  %v1537 = vadd.f32 %v1285, %v1536
  %v1538 = vpop.f32.mrf.mxu0
  %v1539 = vadd.f32 %v1289, %v1538
  %v1540 = vpop.f32.mrf.mxu0
  %v1541 = vadd.f32 %v1285, %v1540
  %v1542 = vpop.f32.mrf.mxu0
  %v1543 = vadd.f32 %v1289, %v1542
  %1544 = vmatprep.mubr.bf16.mxu0 0
  %1545 = vmatmul.mubr.bf16.gmra.mxu0 %v1245
  %v1546 = vpop.f32.mrf.mxu0
  %v1547 = vadd.f32 %v1285, %v1546
  %v1548 = vpop.f32.mrf.mxu0
  %v1549 = vadd.f32 %v1289, %v1548
  %v1550 = vpop.f32.mrf.mxu0
  %v1551 = vadd.f32 %v1285, %v1550
  %v1552 = vpop.f32.mrf.mxu0
  %v1553 = vadd.f32 %v1289, %v1552
  %1554 = vmatprep.mubr.bf16.mxu0 0
  %1555 = vmatmul.mubr.bf16.gmra.mxu0 %v1246
  %v1556 = vpop.f32.mrf.mxu0
  %v1557 = vadd.f32 %v1285, %v1556
  %v1558 = vpop.f32.mrf.mxu0
  %v1559 = vadd.f32 %v1289, %v1558
  %v1560 = vpop.f32.mrf.mxu0
  %v1561 = vadd.f32 %v1285, %v1560
  %v1562 = vpop.f32.mrf.mxu0
  %v1563 = vadd.f32 %v1289, %v1562
  %1564 = vmatprep.mubr.bf16.mxu0 0
  %1565 = vmatmul.mubr.bf16.gmra.mxu0 %v1247
  %v1566 = vpop.f32.mrf.mxu0
  %v1567 = vadd.f32 %v1285, %v1566
  %v1568 = vpop.f32.mrf.mxu0
  %v1569 = vadd.f32 %v1289, %v1568
  %v1570 = vpop.f32.mrf.mxu0
  %v1571 = vadd.f32 %v1285, %v1570
  %v1572 = vpop.f32.mrf.mxu0
  %v1573 = vadd.f32 %v1289, %v1572
  %1574 = vdwg.mxu0
  %1575 = vmatprep.subr.bf16.mxu0 %v1429
  %1576 = vmatpush1.bf16.msra.mxu0 %v1428
  %1577 = vmatprep.subr.bf16.mxu0 %v1425
  %1578 = vmatpush1.bf16.msra.mxu0 %v1424
  %1579 = vmatprep.subr.bf16.mxu0 %v1421
  %1580 = vmatpush1.bf16.msra.mxu0 %v1420
  %1581 = vmatprep.subr.bf16.mxu0 %v1417
  %1582 = vmatpush1.bf16.msra.mxu0 %v1416
  %1583 = vmatprep.subr.bf16.mxu0 %v1413
  %1584 = vmatpush1.bf16.msra.mxu0 %v1412
  %1585 = vmatprep.subr.bf16.mxu0 %v1409
  %1586 = vmatpush1.bf16.msra.mxu0 %v1408
  %1587 = vmatprep.subr.bf16.mxu0 %v1405
  %1588 = vmatpush1.bf16.msra.mxu0 %v1404
  %1589 = vmatprep.subr.bf16.mxu0 %v1401
  %1590 = vmatpush1.bf16.msra.mxu0 %v1400
  %1591 = vmatprep.subr.bf16.mxu0 0
  %1592 = vmatpush2.bf16.msra.mxu0 0
  %1593 = vmatprep.subr.bf16.mxu0 0
  %1594 = vmatpush2.bf16.msra.mxu0 0
  %1595 = vmatprep.subr.bf16.mxu0 0
  %1596 = vmatpush2.bf16.msra.mxu0 0
  %1597 = vmatprep.subr.bf16.mxu0 0
  %1598 = vmatpush2.bf16.msra.mxu0 0
  %1599 = vmatprep.subr.bf16.mxu0 0
  %1600 = vmatpush2.bf16.msra.mxu0 0
  %1601 = vmatprep.subr.bf16.mxu0 0
  %1602 = vmatpush2.bf16.msra.mxu0 0
  %1603 = vmatprep.subr.bf16.mxu0 0
  %1604 = vmatpush2.bf16.msra.mxu0 0
  %1605 = vmatprep.subr.bf16.mxu0 0
  %1606 = vmatpush2.bf16.msra.mxu0 0
  %1607 = vmatprep.mubr.bf16.mxu0 0
  %1608 = vmatmul.mubr.bf16.gmra.mxu0 %v1240
  %v1609 = vpop.f32.mrf.mxu0
  %v1610 = vadd.f32 %v1293, %v1609
  %v1611 = vpop.f32.mrf.mxu0
  %v1612 = vadd.f32 %v1297, %v1611
  %v1613 = vpop.f32.mrf.mxu0
  %v1614 = vadd.f32 %v1293, %v1613
  %v1615 = vpop.f32.mrf.mxu0
  %v1616 = vadd.f32 %v1297, %v1615
  %1617 = vmatprep.mubr.bf16.mxu0 0
  %1618 = vmatmul.mubr.bf16.gmra.mxu0 %v1241
  %v1619 = vpop.f32.mrf.mxu0
  %v1620 = vadd.f32 %v1293, %v1619
  %v1621 = vpop.f32.mrf.mxu0
  %v1622 = vadd.f32 %v1297, %v1621
  %v1623 = vpop.f32.mrf.mxu0
  %v1624 = vadd.f32 %v1293, %v1623
  %v1625 = vpop.f32.mrf.mxu0
  %v1626 = vadd.f32 %v1297, %v1625
  %1627 = vmatprep.mubr.bf16.mxu0 0
  %1628 = vmatmul.mubr.bf16.gmra.mxu0 %v1242
  %v1629 = vpop.f32.mrf.mxu0
  %v1630 = vadd.f32 %v1293, %v1629
  %v1631 = vpop.f32.mrf.mxu0
  %v1632 = vadd.f32 %v1297, %v1631
  %v1633 = vpop.f32.mrf.mxu0
  %v1634 = vadd.f32 %v1293, %v1633
  %v1635 = vpop.f32.mrf.mxu0
  %v1636 = vadd.f32 %v1297, %v1635
  %1637 = vmatprep.mubr.bf16.mxu0 0
  %1638 = vmatmul.mubr.bf16.gmra.mxu0 %v1243
  %v1639 = vpop.f32.mrf.mxu0
  %v1640 = vadd.f32 %v1293, %v1639
  %v1641 = vpop.f32.mrf.mxu0
  %v1642 = vadd.f32 %v1297, %v1641
  %v1643 = vpop.f32.mrf.mxu0
  %v1644 = vadd.f32 %v1293, %v1643
  %v1645 = vpop.f32.mrf.mxu0
  %v1646 = vadd.f32 %v1297, %v1645
  %1647 = vmatprep.mubr.bf16.mxu0 0
  %1648 = vmatmul.mubr.bf16.gmra.mxu0 %v1244
  %v1649 = vpop.f32.mrf.mxu0
  %v1650 = vadd.f32 %v1293, %v1649
  %v1651 = vpop.f32.mrf.mxu0
  %v1652 = vadd.f32 %v1297, %v1651
  %v1653 = vpop.f32.mrf.mxu0
  %v1654 = vadd.f32 %v1293, %v1653
  %v1655 = vpop.f32.mrf.mxu0
  %v1656 = vadd.f32 %v1297, %v1655
  %1657 = vmatprep.mubr.bf16.mxu0 0
  %1658 = vmatmul.mubr.bf16.gmra.mxu0 %v1245
  %v1659 = vpop.f32.mrf.mxu0
  %v1660 = vadd.f32 %v1293, %v1659
  %v1661 = vpop.f32.mrf.mxu0
  %v1662 = vadd.f32 %v1297, %v1661
  %v1663 = vpop.f32.mrf.mxu0
  %v1664 = vadd.f32 %v1293, %v1663
  %v1665 = vpop.f32.mrf.mxu0
  %v1666 = vadd.f32 %v1297, %v1665
  %1667 = vmatprep.mubr.bf16.mxu0 0
  %1668 = vmatmul.mubr.bf16.gmra.mxu0 %v1246
  %v1669 = vpop.f32.mrf.mxu0
  %v1670 = vadd.f32 %v1293, %v1669
  %v1671 = vpop.f32.mrf.mxu0
  %v1672 = vadd.f32 %v1297, %v1671
  %v1673 = vpop.f32.mrf.mxu0
  %v1674 = vadd.f32 %v1293, %v1673
  %v1675 = vpop.f32.mrf.mxu0
  %v1676 = vadd.f32 %v1297, %v1675
  %1677 = vmatprep.mubr.bf16.mxu0 0
  %1678 = vmatmul.mubr.bf16.gmra.mxu0 %v1247
  %v1679 = vpop.f32.mrf.mxu0
  %v1680 = vadd.f32 %v1293, %v1679
  %v1681 = vpop.f32.mrf.mxu0
  %v1682 = vadd.f32 %v1297, %v1681
  %v1683 = vpop.f32.mrf.mxu0
  %v1684 = vadd.f32 %v1293, %v1683
  %v1685 = vpop.f32.mrf.mxu0
  %v1686 = vadd.f32 %v1297, %v1685
  %1687 = vdwg.mxu0
  %v1688 = vld [vmem:[%s0] sm:$0xff]
  %v1689 = vld [vmem:[%s0 + $0x8] sm:$0xff]
  %v1690 = vld [vmem:[%s0 + $0x10] sm:$0xff]
  %v1691 = vld [vmem:[%s0 + $0x18] sm:$0xff]
  %v1692 = vld [vmem:[%s0 + $0x20] sm:$0xff]
  %v1693 = vld [vmem:[%s0 + $0x28] sm:$0xff]
  %v1694 = vld [vmem:[%s0 + $0x30] sm:$0xff]
  %v1695 = vld [vmem:[%s0 + $0x38] sm:$0xff]
  %v1696 = vld [vmem:[%s0 + $0x40] sm:$0xff]
  %v1697 = vld [vmem:[%s0 + $0x48] sm:$0xff]
  %v1698 = vld [vmem:[%s0 + $0x50] sm:$0xff]
  %v1699 = vld [vmem:[%s0 + $0x58] sm:$0xff]
  %v1700 = vld [vmem:[%s0 + $0x60] sm:$0xff]
  %v1701 = vld [vmem:[%s0 + $0x68] sm:$0xff]
  %v1702 = vld [vmem:[%s0 + $0x70] sm:$0xff]
  %v1703 = vld [vmem:[%s0 + $0x78] sm:$0xff]
  %v1704 = vld [vmem:[%s0 + $0x80] sm:$0xff]
  %v1705 = vld [vmem:[%s0 + $0x88] sm:$0xff]
  %v1706 = vld [vmem:[%s0 + $0x90] sm:$0xff]
  %v1707 = vld [vmem:[%s0 + $0x98] sm:$0xff]
  %v1708 = vld [vmem:[%s0 + $0xa0] sm:$0xff]
  %v1709 = vld [vmem:[%s0 + $0xa8] sm:$0xff]
  %v1710 = vld [vmem:[%s0 + $0xb0] sm:$0xff]
  %v1711 = vld [vmem:[%s0 + $0xb8] sm:$0xff]
  %v1712 = vld [vmem:[%s0 + $0xc0] sm:$0xff]
  %v1713 = vld [vmem:[%s0 + $0xc8] sm:$0xff]
  %v1714 = vld [vmem:[%s0 + $0xd0] sm:$0xff]
  %v1715 = vld [vmem:[%s0 + $0xd8] sm:$0xff]
  %v1716 = vld [vmem:[%s0 + $0xe0] sm:$0xff]
  %v1717 = vld [vmem:[%s0 + $0xe8] sm:$0xff]
  %v1718 = vld [vmem:[%s0 + $0xf0] sm:$0xff]
  %v1719 = vld [vmem:[%s0 + $0xf8] sm:$0xff]
  %v1720 = vld [vmem:[%s0 + $0x100] sm:$0xff]
  %v1721 = vld [vmem:[%s0 + $0x108] sm:$0xff]
  %v1722 = vld [vmem:[%s0 + $0x110] sm:$0xff]
  %v1723 = vld [vmem:[%s0 + $0x118] sm:$0xff]
  %v1724 = vld [vmem:[%s0 + $0x120] sm:$0xff]
  %v1725 = vld [vmem:[%s0 + $0x128] sm:$0xff]
  %v1726 = vld [vmem:[%s0 + $0x130] sm:$0xff]
  %v1727 = vld [vmem:[%s0 + $0x138] sm:$0xff]
  %v1728 = vld [vmem:[%s0 + $0x140] sm:$0xff]
  %v1729 = vld [vmem:[%s0 + $0x148] sm:$0xff]
  %v1730 = vld [vmem:[%s0 + $0x150] sm:$0xff]
  %v1731 = vld [vmem:[%s0 + $0x158] sm:$0xff]
  %v1732 = vld [vmem:[%s0 + $0x160] sm:$0xff]
  %v1733 = vld [vmem:[%s0 + $0x168] sm:$0xff]
  %v1734 = vld [vmem:[%s0 + $0x170] sm:$0xff]
  %v1735 = vld [vmem:[%s0 + $0x178] sm:$0xff]
  %v1736 = vld [vmem:[%s0 + $0x180] sm:$0xff]
  %v1737 = vld [vmem:[%s0 + $0x188] sm:$0xff]
  %v1738 = vld [vmem:[%s0 + $0x190] sm:$0xff]
  %v1739 = vld [vmem:[%s0 + $0x198] sm:$0xff]
  %v1740 = vld [vmem:[%s0 + $0x1a0] sm:$0xff]
  %v1741 = vld [vmem:[%s0 + $0x1a8] sm:$0xff]
  %v1742 = vld [vmem:[%s0 + $0x1b0] sm:$0xff]
  %v1743 = vld [vmem:[%s0 + $0x1b8] sm:$0xff]
  %v1744 = vld [vmem:[%s0 + $0x1c0] sm:$0xff]
  %v1745 = vld [vmem:[%s0 + $0x1c8] sm:$0xff]
  %v1746 = vld [vmem:[%s0 + $0x1d0] sm:$0xff]
  %v1747 = vld [vmem:[%s0 + $0x1d8] sm:$0xff]
  %v1748 = vld [vmem:[%s0 + $0x1e0] sm:$0xff]
  %v1749 = vld [vmem:[%s0 + $0x1e8] sm:$0xff]
  %v1750 = vld [vmem:[%s0 + $0x1f0] sm:$0xff]
  %v1751 = vld [vmem:[%s0 + $0x1f8] sm:$0xff]
  %v1752 = vadd.f32 %v1497, %v1688
  %v1753 = vadd.f32 %v1499, %v1689
  %v1754 = vadd.f32 %v1610, %v1690
  %v1755 = vadd.f32 %v1612, %v1691
  %v1756 = vadd.f32 %v1501, %v1692
  %v1757 = vadd.f32 %v1503, %v1693
  %v1758 = vadd.f32 %v1614, %v1694
  %v1759 = vadd.f32 %v1616, %v1695
  %v1760 = vadd.f32 %v1507, %v1696
  %v1761 = vadd.f32 %v1509, %v1697
  %v1762 = vadd.f32 %v1620, %v1698
  %v1763 = vadd.f32 %v1622, %v1699
  %v1764 = vadd.f32 %v1511, %v1700
  %v1765 = vadd.f32 %v1513, %v1701
  %v1766 = vadd.f32 %v1624, %v1702
  %v1767 = vadd.f32 %v1626, %v1703
  %v1768 = vadd.f32 %v1517, %v1704
  %v1769 = vadd.f32 %v1519, %v1705
  %v1770 = vadd.f32 %v1630, %v1706
  %v1771 = vadd.f32 %v1632, %v1707
  %v1772 = vadd.f32 %v1521, %v1708
  %v1773 = vadd.f32 %v1523, %v1709
  %v1774 = vadd.f32 %v1634, %v1710
  %v1775 = vadd.f32 %v1636, %v1711
  %v1776 = vadd.f32 %v1527, %v1712
  %v1777 = vadd.f32 %v1529, %v1713
  %v1778 = vadd.f32 %v1640, %v1714
  %v1779 = vadd.f32 %v1642, %v1715
  %v1780 = vadd.f32 %v1531, %v1716
  %v1781 = vadd.f32 %v1533, %v1717
  %v1782 = vadd.f32 %v1644, %v1718
  %v1783 = vadd.f32 %v1646, %v1719
  %v1784 = vadd.f32 %v1537, %v1720
  %v1785 = vadd.f32 %v1539, %v1721
  %v1786 = vadd.f32 %v1650, %v1722
  %v1787 = vadd.f32 %v1652, %v1723
  %v1788 = vadd.f32 %v1541, %v1724
  %v1789 = vadd.f32 %v1543, %v1725
  %v1790 = vadd.f32 %v1654, %v1726
  %v1791 = vadd.f32 %v1656, %v1727
  %v1792 = vadd.f32 %v1547, %v1728
  %v1793 = vadd.f32 %v1549, %v1729
  %v1794 = vadd.f32 %v1660, %v1730
  %v1795 = vadd.f32 %v1662, %v1731
  %v1796 = vadd.f32 %v1551, %v1732
  %v1797 = vadd.f32 %v1553, %v1733
  %v1798 = vadd.f32 %v1664, %v1734
  %v1799 = vadd.f32 %v1666, %v1735
  %v1800 = vadd.f32 %v1557, %v1736
  %v1801 = vadd.f32 %v1559, %v1737
  %v1802 = vadd.f32 %v1670, %v1738
  %v1803 = vadd.f32 %v1672, %v1739
  %v1804 = vadd.f32 %v1561, %v1740
  %v1805 = vadd.f32 %v1563, %v1741
  %v1806 = vadd.f32 %v1674, %v1742
  %v1807 = vadd.f32 %v1676, %v1743
  %v1808 = vadd.f32 %v1567, %v1744
  %v1809 = vadd.f32 %v1569, %v1745
  %v1810 = vadd.f32 %v1680, %v1746
  %v1811 = vadd.f32 %v1682, %v1747
  %v1812 = vadd.f32 %v1571, %v1748
  %v1813 = vadd.f32 %v1573, %v1749
  %v1814 = vadd.f32 %v1684, %v1750
  %v1815 = vadd.f32 %v1686, %v1751
  %v1816 = vmax.f32 %v1752, 0.0
  %v1817 = vmax.f32 %v1753, 0.0
  %v1818 = vmax.f32 %v1754, 0.0
  %v1819 = vmax.f32 %v1755, 0.0
  %v1820 = vmax.f32 %v1756, 0.0
  %v1821 = vmax.f32 %v1757, 0.0
  %v1822 = vmax.f32 %v1758, 0.0
  %v1823 = vmax.f32 %v1759, 0.0
  %v1824 = vmax.f32 %v1760, 0.0
  %v1825 = vmax.f32 %v1761, 0.0
  %v1826 = vmax.f32 %v1762, 0.0
  %v1827 = vmax.f32 %v1763, 0.0
  %v1828 = vmax.f32 %v1764, 0.0
  %v1829 = vmax.f32 %v1765, 0.0
  %v1830 = vmax.f32 %v1766, 0.0
  %v1831 = vmax.f32 %v1767, 0.0
  %v1832 = vmax.f32 %v1768, 0.0
  %v1833 = vmax.f32 %v1769, 0.0
  %v1834 = vmax.f32 %v1770, 0.0
  %v1835 = vmax.f32 %v1771, 0.0
  %v1836 = vmax.f32 %v1772, 0.0
  %v1837 = vmax.f32 %v1773, 0.0
  %v1838 = vmax.f32 %v1774, 0.0
  %v1839 = vmax.f32 %v1775, 0.0
  %v1840 = vmax.f32 %v1776, 0.0
  %v1841 = vmax.f32 %v1777, 0.0
  %v1842 = vmax.f32 %v1778, 0.0
  %v1843 = vmax.f32 %v1779, 0.0
  %v1844 = vmax.f32 %v1780, 0.0
  %v1845 = vmax.f32 %v1781, 0.0
  %v1846 = vmax.f32 %v1782, 0.0
  %v1847 = vmax.f32 %v1783, 0.0
  %v1848 = vmax.f32 %v1784, 0.0
  %v1849 = vmax.f32 %v1785, 0.0
  %v1850 = vmax.f32 %v1786, 0.0
  %v1851 = vmax.f32 %v1787, 0.0
  %v1852 = vmax.f32 %v1788, 0.0
  %v1853 = vmax.f32 %v1789, 0.0
  %v1854 = vmax.f32 %v1790, 0.0
  %v1855 = vmax.f32 %v1791, 0.0
  %v1856 = vmax.f32 %v1792, 0.0
  %v1857 = vmax.f32 %v1793, 0.0
  %v1858 = vmax.f32 %v1794, 0.0
  %v1859 = vmax.f32 %v1795, 0.0
  %v1860 = vmax.f32 %v1796, 0.0
  %v1861 = vmax.f32 %v1797, 0.0
  %v1862 = vmax.f32 %v1798, 0.0
  %v1863 = vmax.f32 %v1799, 0.0
  %v1864 = vmax.f32 %v1800, 0.0
  %v1865 = vmax.f32 %v1801, 0.0
  %v1866 = vmax.f32 %v1802, 0.0
  %v1867 = vmax.f32 %v1803, 0.0
  %v1868 = vmax.f32 %v1804, 0.0
  %v1869 = vmax.f32 %v1805, 0.0
  %v1870 = vmax.f32 %v1806, 0.0
  %v1871 = vmax.f32 %v1807, 0.0
  %v1872 = vmax.f32 %v1808, 0.0
  %v1873 = vmax.f32 %v1809, 0.0
  %v1874 = vmax.f32 %v1810, 0.0
  %v1875 = vmax.f32 %v1811, 0.0
  %v1876 = vmax.f32 %v1812, 0.0
  %v1877 = vmax.f32 %v1813, 0.0
  %v1878 = vmax.f32 %v1814, 0.0
  %v1879 = vmax.f32 %v1815, 0.0
  %1880 = vst [vmem:[%s7] sm:$0xff] %v1816
  %1881 = vst [vmem:[%s7 + $0x8] sm:$0xff] %v1817
  %1882 = vst [vmem:[%s7 + $0x10] sm:$0xff] %v1818
  %1883 = vst [vmem:[%s7 + $0x18] sm:$0xff] %v1819
  %1884 = vst [vmem:[%s7 + $0x20] sm:$0xff] %v1820
  %1885 = vst [vmem:[%s7 + $0x28] sm:$0xff] %v1821
  %1886 = vst [vmem:[%s7 + $0x30] sm:$0xff] %v1822
  %1887 = vst [vmem:[%s7 + $0x38] sm:$0xff] %v1823
  %1888 = vst [vmem:[%s7 + $0x40] sm:$0xff] %v1824
  %1889 = vst [vmem:[%s7 + $0x48] sm:$0xff] %v1825
  %1890 = vst [vmem:[%s7 + $0x50] sm:$0xff] %v1826
  %1891 = vst [vmem:[%s7 + $0x58] sm:$0xff] %v1827
  %1892 = vst [vmem:[%s7 + $0x60] sm:$0xff] %v1828
  %1893 = vst [vmem:[%s7 + $0x68] sm:$0xff] %v1829
  %1894 = vst [vmem:[%s7 + $0x70] sm:$0xff] %v1830
  %1895 = vst [vmem:[%s7 + $0x78] sm:$0xff] %v1831
  %1896 = vst [vmem:[%s7 + $0x80] sm:$0xff] %v1832
  %1897 = vst [vmem:[%s7 + $0x88] sm:$0xff] %v1833
  %1898 = vst [vmem:[%s7 + $0x90] sm:$0xff] %v1834
  %1899 = vst [vmem:[%s7 + $0x98] sm:$0xff] %v1835
  %1900 = vst [vmem:[%s7 + $0xa0] sm:$0xff] %v1836
  %1901 = vst [vmem:[%s7 + $0xa8] sm:$0xff] %v1837
  %1902 = vst [vmem:[%s7 + $0xb0] sm:$0xff] %v1838
  %1903 = vst [vmem:[%s7 + $0xb8] sm:$0xff] %v1839
  %1904 = vst [vmem:[%s7 + $0xc0] sm:$0xff] %v1840
  %1905 = vst [vmem:[%s7 + $0xc8] sm:$0xff] %v1841
  %1906 = vst [vmem:[%s7 + $0xd0] sm:$0xff] %v1842
  %1907 = vst [vmem:[%s7 + $0xd8] sm:$0xff] %v1843
  %1908 = vst [vmem:[%s7 + $0xe0] sm:$0xff] %v1844
  %1909 = vst [vmem:[%s7 + $0xe8] sm:$0xff] %v1845
  %1910 = vst [vmem:[%s7 + $0xf0] sm:$0xff] %v1846
  %1911 = vst [vmem:[%s7 + $0xf8] sm:$0xff] %v1847
  %1912 = vst [vmem:[%s7 + $0x100] sm:$0xff] %v1848
  %1913 = vst [vmem:[%s7 + $0x108] sm:$0xff] %v1849
  %1914 = vst [vmem:[%s7 + $0x110] sm:$0xff] %v1850
  %1915 = vst [vmem:[%s7 + $0x118] sm:$0xff] %v1851
  %1916 = vst [vmem:[%s7 + $0x120] sm:$0xff] %v1852
  %1917 = vst [vmem:[%s7 + $0x128] sm:$0xff] %v1853
  %1918 = vst [vmem:[%s7 + $0x130] sm:$0xff] %v1854
  %1919 = vst [vmem:[%s7 + $0x138] sm:$0xff] %v1855
  %1920 = vst [vmem:[%s7 + $0x140] sm:$0xff] %v1856
  %1921 = vst [vmem:[%s7 + $0x148] sm:$0xff] %v1857
  %1922 = vst [vmem:[%s7 + $0x150] sm:$0xff] %v1858
  %1923 = vst [vmem:[%s7 + $0x158] sm:$0xff] %v1859
  %1924 = vst [vmem:[%s7 + $0x160] sm:$0xff] %v1860
  %1925 = vst [vmem:[%s7 + $0x168] sm:$0xff] %v1861
  %1926 = vst [vmem:[%s7 + $0x170] sm:$0xff] %v1862
  %1927 = vst [vmem:[%s7 + $0x178] sm:$0xff] %v1863
  %1928 = vst [vmem:[%s7 + $0x180] sm:$0xff] %v1864
  %1929 = vst [vmem:[%s7 + $0x188] sm:$0xff] %v1865
  %1930 = vst [vmem:[%s7 + $0x190] sm:$0xff] %v1866
  %1931 = vst [vmem:[%s7 + $0x198] sm:$0xff] %v1867
  %1932 = vst [vmem:[%s7 + $0x1a0] sm:$0xff] %v1868
  %1933 = vst [vmem:[%s7 + $0x1a8] sm:$0xff] %v1869
  %1934 = vst [vmem:[%s7 + $0x1b0] sm:$0xff] %v1870
  %1935 = vst [vmem:[%s7 + $0x1b8] sm:$0xff] %v1871
  %1936 = vst [vmem:[%s7 + $0x1c0] sm:$0xff] %v1872
  %1937 = vst [vmem:[%s7 + $0x1c8] sm:$0xff] %v1873
  %1938 = vst [vmem:[%s7 + $0x1d0] sm:$0xff] %v1874
  %1939 = vst [vmem:[%s7 + $0x1d8] sm:$0xff] %v1875
  %1940 = vst [vmem:[%s7 + $0x1e0] sm:$0xff] %v1876
  %1941 = vst [vmem:[%s7 + $0x1e8] sm:$0xff] %v1877
  %1942 = vst [vmem:[%s7 + $0x1f0] sm:$0xff] %v1878
  %1943 = vst [vmem:[%s7 + $0x1f8] sm:$0xff] %v1879
  // Predicated region
  $region30: #{resblock_forward_packed.1} parent=0 // pred_check
    _
  $region31: #{resblock_forward_packed.1} parent=0 // pred_check_branch
    %1945 = sbr.rel (0) target = $region33
  $region32: #{resblock_forward_packed.1} parent=0 // pred_region
    _
  $region33: #{resblock_forward_packed.1} parent=0 // pred_fallthru
    _
  // Predicated region
  $region34: #{resblock_forward_packed.1} parent=0 // pred_check
    _
  $region35: #{resblock_forward_packed.1} parent=0 // pred_check_branch
    %1947 = sbr.rel (0) target = $region37
  $region36: #{resblock_forward_packed.1} parent=0 // pred_region
    _
  $region37: #{resblock_forward_packed.1} parent=0 // pred_fallthru
    _

</llo_original>
